<compile_context>
chip_gen: v7x
topology: tpu7x:2x2x1
jax: 0.10.0
libtpu: 0.0.40
codegen_flags: <defaults>
</compile_context>

<pallas_src>
import functools

import jax
import jax.numpy as jnp
import numpy as np
from jax.experimental import pallas as pl
from jax.experimental.pallas import tpu as pltpu


# ----------------------------------------------------------------------------
# Fused Pallas kernel (entire forward pass, single invocation, VMEM resident)
# ----------------------------------------------------------------------------
def _make_fused_kernel(*, T, B, H, num_dirs, num_layer, in_size, out_size, offs):
    """kernel(x, last_idx, slab, out)

    x:        (T, B, in_size)  time-major, batch padded to a multiple of 8
    last_idx: (B, 1) int32     last valid timestep per row
    slab:     (R, W) f32       all packed weights/biases (see _pack_params)
    out:      (B, out_size)    sigmoid(fc(hidden_at_last_valid_step))
    """
    DH = H * num_dirs          # width of one gate chunk == per-layer hidden width
    G = 4 * DH                 # fused gate width (128 lanes for the demo config)

    def kernel(x_ref, idx_ref, slab_ref, out_ref):
        last_idx = idx_ref[...]                               # (B, 1) int32

        def seg(name):
            r0, nr = offs[name]
            return slab_ref[r0:r0 + nr, :]                    # static slice -> load

        # Layer input as T time-slices (natural time order).
        xs = [x_ref[t] for t in range(T)]                     # each (B, in_dim)

        hidden_f = jnp.zeros((B, H), jnp.float32)
        hidden_b = jnp.zeros((B, H), jnp.float32)

        for layer in range(num_layer):
            in_dim = in_size if layer == 0 else DH
            w_in = seg(f"w_in_{layer}")[:, :G]                # (num_dirs*in_dim, G)
            w_hh = seg(f"w_hh_{layer}")[:, :G]                # (DH, G) block-structured
            bias = seg(f"b_{layer}")[:, :G]                   # (1, G)  (b_ih + b_hh)

            # ---- hoisted input->gate projection: one matmul for all T steps and
            #      both directions (bwd columns of w_in read the reversed input). ---
            if num_dirs == 2:
                x_comb = jnp.concatenate(
                    [jnp.concatenate([xs[t], xs[T - 1 - t]], axis=-1)
                     for t in range(T)], axis=0)              # (T*B, 2*in_dim)
            else:
                x_comb = jnp.concatenate(xs, axis=0)          # (T*B, in_dim)
            xp = jnp.dot(x_comb, w_in,
                         preferred_element_type=jnp.float32) + bias   # (T*B, G)

            # ---- serial recurrence: only h @ W_hh stays on the per-step chain. ----
            h = jnp.zeros((B, DH), jnp.float32)               # lanes [h_fwd | h_bwd]
            c = jnp.zeros((B, DH), jnp.float32)
            hs = []
            for i in range(T):                                # fully unrolled, static
                gates = xp[i * B:(i + 1) * B, :] + jnp.dot(
                    h, w_hh, preferred_element_type=jnp.float32)      # (B, G)
                sig = jax.nn.sigmoid(gates)                   # 1 EUP pass, full lanes
                tnh = jnp.tanh(gates)                         # 1 EUP pass, full lanes
                i_g = sig[:, 0 * DH:1 * DH]
                f_g = sig[:, 1 * DH:2 * DH]
                g_g = tnh[:, 2 * DH:3 * DH]
                o_g = sig[:, 3 * DH:4 * DH]
                c = f_g * c + i_g * g_g
                h = o_g * jnp.tanh(c)
                hs.append(h)

                if layer == num_layer - 1:
                    # Fold the last-valid-step gather into the recurrence.
                    hit_f = last_idx == i                     # fwd time index == i
                    hidden_f = jnp.where(hit_f, h[:, :H], hidden_f)
                    if num_dirs == 2:
                        hit_b = last_idx == (T - 1 - i)       # bwd time index == T-1-i
                        hidden_b = jnp.where(hit_b, h[:, H:], hidden_b)

            if layer < num_layer - 1:
                if num_dirs == 2:
                    # Next layer's input at time t = [h_fwd@t , h_bwd@t]
                    xs = [jnp.concatenate([hs[t][:, :H], hs[T - 1 - t][:, H:]], axis=-1)
                          for t in range(T)]
                else:
                    xs = hs

        hidden = (hidden_f if num_dirs == 1
                  else jnp.concatenate([hidden_f, hidden_b], axis=-1))   # (B, DH)

        # Fused FC + sigmoid.
        w_fc = seg("fc_w")[:, :out_size]                      # (DH, O)
        b_fc = seg("fc_b")[:, :out_size]                      # (1, O)
        out_ref[...] = jax.nn.sigmoid(
            jnp.dot(hidden, w_fc, preferred_element_type=jnp.float32) + b_fc)

    return kernel


# ----------------------------------------------------------------------------
# One-time weight packing into a single lane-padded VMEM slab
# ----------------------------------------------------------------------------
def _pack_params(params, input_size):
    """Pack all LSTM + FC weights into one (rows, G) f32 slab.

    Gate column layout (gate-major, direction-minor), each chunk H lanes wide:
        [ i_f i_b | f_f f_b | g_f g_b | o_f o_b ]
    w_in_{layer}:  rows [0:in_dim] = W_ih_fwd^T, rows [in_dim:2*in_dim] = W_ih_bwd^T
                   (the bwd rows are multiplied by the time-REVERSED input in-kernel).
    w_hh_{layer}:  rows [0:H] = W_hh_fwd^T, rows [H:2H] = W_hh_bwd^T, block-structured
                   so fwd rows only feed fwd gate columns (and vice versa).
    """
    lstm = params["lstm"]
    num_layer = len(lstm)
    num_dirs = len(lstm[0])
    H = lstm[0][0]["w_hh"].shape[1]
    DH = H * num_dirs
    G = 4 * DH
    O = params["fc_w"].shape[0]

    parts = []
    for layer, dirs in enumerate(lstm):
        in_dim = input_size if layer == 0 else DH
        w_in = np.zeros((num_dirs * in_dim, G), np.float32)
        w_hh = np.zeros((DH, G), np.float32)
        b = np.zeros((1, G), np.float32)
        for d, p in enumerate(dirs):
            wih_t = np.asarray(p["w_ih"], np.float32).T       # (in_dim, 4H) [i,f,g,o]
            whh_t = np.asarray(p["w_hh"], np.float32).T       # (H, 4H)
            bias = np.asarray(p["b_ih"], np.float32) + np.asarray(p["b_hh"], np.float32)
            for g in range(4):
                c0 = g * DH + d * H
                w_in[d * in_dim:(d + 1) * in_dim, c0:c0 + H] = wih_t[:, g * H:(g + 1) * H]
                w_hh[d * H:(d + 1) * H, c0:c0 + H] = whh_t[:, g * H:(g + 1) * H]
                b[0, c0:c0 + H] = bias[g * H:(g + 1) * H]
        parts += [(f"w_in_{layer}", w_in), (f"w_hh_{layer}", w_hh), (f"b_{layer}", b)]

    parts += [("fc_w", np.asarray(params["fc_w"], np.float32).T),        # (DH, O)
              ("fc_b", np.asarray(params["fc_b"], np.float32).reshape(1, -1))]

    width = G
    offs, rows, cur = {}, [], 0
    for name, arr in parts:
        r, c = arr.shape
        rows.append(np.pad(arr, ((0, 0), (0, width - c))))
        offs[name] = (cur, r)
        cur += r
        pad = (-cur) % 8                                       # 8-row align each segment
        if pad:
            rows.append(np.zeros((pad, width), np.float32))
            cur += pad
    slab = jnp.asarray(np.concatenate(rows, axis=0))

    meta = dict(num_layer=num_layer, num_dirs=num_dirs, H=H,
                in_size=input_size, out_size=O, offs=offs)
    return slab, meta


# ----------------------------------------------------------------------------
# Wrapper: batch padding, last_idx from mask, single pallas_call
# ----------------------------------------------------------------------------
def sentiment_lstm_forward(slab, meta, x_btd, mask):
    """Full forward pass matching SentimentLSTM.forward.

    x_btd: (B, T, input_size) float32 (batch_first, like PyTorch)
    mask:  (B, T), 1.0 on valid steps
    returns (B, 2) float32 sigmoid outputs
    """
    B, T, in_size = x_btd.shape
    O = meta["out_size"]
    B_pad = max(8, ((B + 7) // 8) * 8)                         # fill f32 sublanes

    # Last valid index per row, exact int32 (guarded for all-padding rows).
    lengths = jnp.sum(mask.astype(jnp.float32), axis=1).astype(jnp.int32)
    last_idx = jnp.maximum(lengths - 1, 0).reshape(B, 1)
    last_idx = jnp.pad(last_idx, ((0, B_pad - B), (0, 0)))

    x = jnp.pad(x_btd.astype(jnp.float32), ((0, B_pad - B), (0, 0), (0, 0)))
    x_tbd = jnp.transpose(x, (1, 0, 2))                        # (T, B_pad, in)

    kernel = _make_fused_kernel(T=T, B=B_pad, H=meta["H"], num_dirs=meta["num_dirs"],
                                num_layer=meta["num_layer"], in_size=in_size,
                                out_size=O, offs=meta["offs"])

    out = pl.pallas_call(
        kernel,
        out_shape=jax.ShapeDtypeStruct((B_pad, O), jnp.float32),
        in_specs=[pl.BlockSpec(memory_space=pltpu.MemorySpace.VMEM)] * 3,
        out_specs=pl.BlockSpec(memory_space=pltpu.MemorySpace.VMEM),
    )(x_tbd, last_idx, slab)
    return out[:B]


# ----------------------------------------------------------------------------
# Deterministic parameter construction (PyTorch-style shapes & init scale)
# ----------------------------------------------------------------------------
def init_params(key, input_size, hidden_size, num_layer, bidirectional_bool):
    num_dirs = 2 if bidirectional_bool else 1
    H = hidden_size // num_dirs
    scale = 1.0 / np.sqrt(H)

    layers = []
    for layer in range(num_layer):
        in_dim = input_size if layer == 0 else H * num_dirs
        dirs = []
        for _ in range(num_dirs):
            key, k1, k2, k3, k4 = jax.random.split(key, 5)
            dirs.append({
                "w_ih": jax.random.uniform(k1, (4 * H, in_dim), jnp.float32, -scale, scale),
                "w_hh": jax.random.uniform(k2, (4 * H, H), jnp.float32, -scale, scale),
                "b_ih": jax.random.uniform(k3, (4 * H,), jnp.float32, -scale, scale),
                "b_hh": jax.random.uniform(k4, (4 * H,), jnp.float32, -scale, scale),
            })
        layers.append(dirs)

    key, kw, kb = jax.random.split(key, 3)
    fc_scale = 1.0 / np.sqrt(hidden_size)
    return {
        "lstm": layers,
        "fc_w": jax.random.uniform(kw, (2, hidden_size), jnp.float32, -fc_scale, fc_scale),
        "fc_b": jax.random.uniform(kb, (2,), jnp.float32, -fc_scale, fc_scale),
    }


# ----------------------------------------------------------------------------
# Pure-JAX reference (correctness check of the fused Pallas kernel)
# ----------------------------------------------------------------------------
def _ref_lstm_dir(x_tbd, w_ih, w_hh, b_ih, b_hh):
    _, B, _ = x_tbd.shape
    H = w_hh.shape[1]

    def step(carry, xt):
        h, c = carry
        g = xt @ w_ih.T + h @ w_hh.T + b_ih + b_hh
        i = jax.nn.sigmoid(g[:, :H])
        f = jax.nn.sigmoid(g[:, H:2 * H])
        gg = jnp.tanh(g[:, 2 * H:3 * H])
        o = jax.nn.sigmoid(g[:, 3 * H:])
        c = f * c + i * gg
        h = o * jnp.tanh(c)
        return (h, c), h

    init = (jnp.zeros((B, H), jnp.float32), jnp.zeros((B, H), jnp.float32))
    _, hs = jax.lax.scan(step, init, x_tbd)
    return hs


def ref_forward(params, x_btd, mask):
    x = jnp.transpose(x_btd, (1, 0, 2))
    for layer in params["lstm"]:
        outs = []
        for d, p in enumerate(layer):
            xin = x if d == 0 else x[::-1]
            o = _ref_lstm_dir(xin, p["w_ih"], p["w_hh"], p["b_ih"], p["b_hh"])
            if d == 1:
                o = o[::-1]
            outs.append(o)
        x = jnp.concatenate(outs, axis=-1)
    lengths = jnp.maximum(jnp.sum(mask, axis=1).astype(jnp.int32) - 1, 0)
    last = x[lengths, jnp.arange(x.shape[1]), :]
    return jax.nn.sigmoid(last @ params["fc_w"].T + params["fc_b"])


# ----------------------------------------------------------------------------
if __name__ == "__main__":
    INPUT_SIZE = 16
    HIDDEN_SIZE = 32
    NUM_LAYER = 2
    BIDIRECTIONAL = True
    B, T = 2, 8

    key = jax.random.PRNGKey(0)
    key, kx = jax.random.split(key)
    params = init_params(key, INPUT_SIZE, HIDDEN_SIZE, NUM_LAYER, BIDIRECTIONAL)
    slab, meta = _pack_params(params, INPUT_SIZE)

    x = jax.random.normal(kx, (B, T, INPUT_SIZE), jnp.float32)
    lengths = jnp.array([T, 5], dtype=jnp.int32)
    mask = (jnp.arange(T)[None, :] < lengths[:, None]).astype(jnp.float32)   # (B, T)

    fwd = jax.jit(functools.partial(sentiment_lstm_forward, slab, meta))
    out = jax.block_until_ready(fwd(x, mask))

    ref = jax.block_until_ready(ref_forward(params, x, mask))
    np.testing.assert_allclose(np.asarray(out), np.asarray(ref), rtol=1e-3, atol=1e-3)
    assert out.shape == (B, 2)

    print("KERNEL_OK")
</pallas_src>

<mosaic_0001>
module attributes {stable_mosaic.version = 11 : i64} {
  func.func @kernel(%arg0: memref<8x8x16xf32, #tpu.memory_space<vmem>>, %arg1: memref<8x1xi32, #tpu.memory_space<vmem>>, %arg2: memref<216x128xf32, #tpu.memory_space<vmem>>, %arg3: memref<8x2xf32, #tpu.memory_space<vmem>>) attributes {dimension_semantics = [], scalar_prefetch = 0 : i64, scratch_operands = 0 : i64, tpu.core_type = #tpu.core_type<tc>} {
    %c0 = arith.constant 0 : index
    %c0_0 = arith.constant 0 : index
    %0 = vector.load %arg1[%c0, %c0_0] : memref<8x1xi32, #tpu.memory_space<vmem>>, vector<8x1xi32>
    %c0_1 = arith.constant 0 : index
    %c0_2 = arith.constant 0 : index
    %c0_3 = arith.constant 0 : index
    %1 = vector.load %arg0[%c0_1, %c0_2, %c0_3] : memref<8x8x16xf32, #tpu.memory_space<vmem>>, vector<1x8x16xf32>
    %2 = vector.shape_cast %1 : vector<1x8x16xf32> to vector<8x16xf32>
    %c1 = arith.constant 1 : index
    %c0_4 = arith.constant 0 : index
    %c0_5 = arith.constant 0 : index
    %3 = vector.load %arg0[%c1, %c0_4, %c0_5] : memref<8x8x16xf32, #tpu.memory_space<vmem>>, vector<1x8x16xf32>
    %4 = vector.shape_cast %3 : vector<1x8x16xf32> to vector<8x16xf32>
    %c2 = arith.constant 2 : index
    %c0_6 = arith.constant 0 : index
    %c0_7 = arith.constant 0 : index
    %5 = vector.load %arg0[%c2, %c0_6, %c0_7] : memref<8x8x16xf32, #tpu.memory_space<vmem>>, vector<1x8x16xf32>
    %6 = vector.shape_cast %5 : vector<1x8x16xf32> to vector<8x16xf32>
    %c3 = arith.constant 3 : index
    %c0_8 = arith.constant 0 : index
    %c0_9 = arith.constant 0 : index
    %7 = vector.load %arg0[%c3, %c0_8, %c0_9] : memref<8x8x16xf32, #tpu.memory_space<vmem>>, vector<1x8x16xf32>
    %8 = vector.shape_cast %7 : vector<1x8x16xf32> to vector<8x16xf32>
    %c4 = arith.constant 4 : index
    %c0_10 = arith.constant 0 : index
    %c0_11 = arith.constant 0 : index
    %9 = vector.load %arg0[%c4, %c0_10, %c0_11] : memref<8x8x16xf32, #tpu.memory_space<vmem>>, vector<1x8x16xf32>
    %10 = vector.shape_cast %9 : vector<1x8x16xf32> to vector<8x16xf32>
    %c5 = arith.constant 5 : index
    %c0_12 = arith.constant 0 : index
    %c0_13 = arith.constant 0 : index
    %11 = vector.load %arg0[%c5, %c0_12, %c0_13] : memref<8x8x16xf32, #tpu.memory_space<vmem>>, vector<1x8x16xf32>
    %12 = vector.shape_cast %11 : vector<1x8x16xf32> to vector<8x16xf32>
    %c6 = arith.constant 6 : index
    %c0_14 = arith.constant 0 : index
    %c0_15 = arith.constant 0 : index
    %13 = vector.load %arg0[%c6, %c0_14, %c0_15] : memref<8x8x16xf32, #tpu.memory_space<vmem>>, vector<1x8x16xf32>
    %14 = vector.shape_cast %13 : vector<1x8x16xf32> to vector<8x16xf32>
    %c7 = arith.constant 7 : index
    %c0_16 = arith.constant 0 : index
    %c0_17 = arith.constant 0 : index
    %15 = vector.load %arg0[%c7, %c0_16, %c0_17] : memref<8x8x16xf32, #tpu.memory_space<vmem>>, vector<1x8x16xf32>
    %16 = vector.shape_cast %15 : vector<1x8x16xf32> to vector<8x16xf32>
    %cst = arith.constant 0.000000e+00 : f32
    %17 = vector.broadcast %cst : f32 to vector<8x16xf32>
    %cst_18 = arith.constant 0.000000e+00 : f32
    %18 = vector.broadcast %cst_18 : f32 to vector<8x16xf32>
    %c0_19 = arith.constant 0 : index
    %c0_20 = arith.constant 0 : index
    %19 = vector.load %arg2[%c0_19, %c0_20] : memref<216x128xf32, #tpu.memory_space<vmem>>, vector<32x128xf32>
    %c32 = arith.constant 32 : index
    %c0_21 = arith.constant 0 : index
    %20 = vector.load %arg2[%c32, %c0_21] : memref<216x128xf32, #tpu.memory_space<vmem>>, vector<32x128xf32>
    %c64 = arith.constant 64 : index
    %c0_22 = arith.constant 0 : index
    %21 = vector.load %arg2[%c64, %c0_22] : memref<216x128xf32, #tpu.memory_space<vmem>>, vector<1x128xf32>
    %22 = tpu.concatenate %2, %16 in 1 : vector<8x16xf32>, vector<8x16xf32> -> vector<8x32xf32>
    %23 = tpu.concatenate %4, %14 in 1 : vector<8x16xf32>, vector<8x16xf32> -> vector<8x32xf32>
    %24 = tpu.concatenate %6, %12 in 1 : vector<8x16xf32>, vector<8x16xf32> -> vector<8x32xf32>
    %25 = tpu.concatenate %8, %10 in 1 : vector<8x16xf32>, vector<8x16xf32> -> vector<8x32xf32>
    %26 = tpu.concatenate %10, %8 in 1 : vector<8x16xf32>, vector<8x16xf32> -> vector<8x32xf32>
    %27 = tpu.concatenate %12, %6 in 1 : vector<8x16xf32>, vector<8x16xf32> -> vector<8x32xf32>
    %28 = tpu.concatenate %14, %4 in 1 : vector<8x16xf32>, vector<8x16xf32> -> vector<8x32xf32>
    %29 = tpu.concatenate %16, %2 in 1 : vector<8x16xf32>, vector<8x16xf32> -> vector<8x32xf32>
    %30 = tpu.concatenate %22, %23, %24, %25, %26, %27, %28, %29 in 0 : vector<8x32xf32>, vector<8x32xf32>, vector<8x32xf32>, vector<8x32xf32>, vector<8x32xf32>, vector<8x32xf32>, vector<8x32xf32>, vector<8x32xf32> -> vector<64x32xf32>
    %cst_23 = arith.constant dense<0.000000e+00> : vector<64x128xf32>
    %31 = tpu.matmul %30, %19, %cst_23 {dimension_numbers = #tpu.dot_dimension_numbers<[1], [0], [0], [1], [0, 0, 1, 1], [], []>} : vector<64x32xf32>, vector<32x128xf32>, vector<64x128xf32> -> vector<64x128xf32>
    %32 = vector.broadcast %21 : vector<1x128xf32> to vector<64x128xf32>
    %33 = arith.addf %31, %32 : vector<64x128xf32>
    %cst_24 = arith.constant 0.000000e+00 : f32
    %34 = vector.broadcast %cst_24 : f32 to vector<8x32xf32>
    %cst_25 = arith.constant 0.000000e+00 : f32
    %35 = vector.broadcast %cst_25 : f32 to vector<8x32xf32>
    %36 = vector.extract_strided_slice %33 {offsets = [0, 0], sizes = [8, 128], strides = [1, 1]} : vector<64x128xf32> to vector<8x128xf32>
    %cst_26 = arith.constant dense<0.000000e+00> : vector<8x128xf32>
    %37 = tpu.matmul %34, %20, %cst_26 {dimension_numbers = #tpu.dot_dimension_numbers<[1], [0], [0], [1], [0, 0, 1, 1], [], []>} : vector<8x32xf32>, vector<32x128xf32>, vector<8x128xf32> -> vector<8x128xf32>
    %38 = arith.addf %36, %37 : vector<8x128xf32>
    %39 = arith.negf %38 : vector<8x128xf32>
    %40 = math.exp %39 : vector<8x128xf32>
    %cst_27 = arith.constant 1.000000e+00 : f32
    %41 = vector.broadcast %cst_27 : f32 to vector<8x128xf32>
    %42 = arith.addf %41, %40 : vector<8x128xf32>
    %43 = arith.divf %41, %42 : vector<8x128xf32>
    %44 = math.tanh %38 : vector<8x128xf32>
    %45 = vector.extract_strided_slice %43 {offsets = [0, 0], sizes = [8, 32], strides = [1, 1]} : vector<8x128xf32> to vector<8x32xf32>
    %46 = vector.extract_strided_slice %43 {offsets = [0, 32], sizes = [8, 32], strides = [1, 1]} : vector<8x128xf32> to vector<8x32xf32>
    %47 = vector.extract_strided_slice %44 {offsets = [0, 64], sizes = [8, 32], strides = [1, 1]} : vector<8x128xf32> to vector<8x32xf32>
    %48 = vector.extract_strided_slice %43 {offsets = [0, 96], sizes = [8, 32], strides = [1, 1]} : vector<8x128xf32> to vector<8x32xf32>
    %49 = arith.mulf %46, %35 : vector<8x32xf32>
    %50 = arith.mulf %45, %47 : vector<8x32xf32>
    %51 = arith.addf %49, %50 : vector<8x32xf32>
    %52 = math.tanh %51 : vector<8x32xf32>
    %53 = arith.mulf %48, %52 : vector<8x32xf32>
    %54 = vector.extract_strided_slice %33 {offsets = [8, 0], sizes = [8, 128], strides = [1, 1]} : vector<64x128xf32> to vector<8x128xf32>
    %cst_28 = arith.constant dense<0.000000e+00> : vector<8x128xf32>
    %55 = tpu.matmul %53, %20, %cst_28 {dimension_numbers = #tpu.dot_dimension_numbers<[1], [0], [0], [1], [0, 0, 1, 1], [], []>} : vector<8x32xf32>, vector<32x128xf32>, vector<8x128xf32> -> vector<8x128xf32>
    %56 = arith.addf %54, %55 : vector<8x128xf32>
    %57 = arith.negf %56 : vector<8x128xf32>
    %58 = math.exp %57 : vector<8x128xf32>
    %cst_29 = arith.constant 1.000000e+00 : f32
    %59 = vector.broadcast %cst_29 : f32 to vector<8x128xf32>
    %60 = arith.addf %59, %58 : vector<8x128xf32>
    %61 = arith.divf %59, %60 : vector<8x128xf32>
    %62 = math.tanh %56 : vector<8x128xf32>
    %63 = vector.extract_strided_slice %61 {offsets = [0, 0], sizes = [8, 32], strides = [1, 1]} : vector<8x128xf32> to vector<8x32xf32>
    %64 = vector.extract_strided_slice %61 {offsets = [0, 32], sizes = [8, 32], strides = [1, 1]} : vector<8x128xf32> to vector<8x32xf32>
    %65 = vector.extract_strided_slice %62 {offsets = [0, 64], sizes = [8, 32], strides = [1, 1]} : vector<8x128xf32> to vector<8x32xf32>
    %66 = vector.extract_strided_slice %61 {offsets = [0, 96], sizes = [8, 32], strides = [1, 1]} : vector<8x128xf32> to vector<8x32xf32>
    %67 = arith.mulf %64, %51 : vector<8x32xf32>
    %68 = arith.mulf %63, %65 : vector<8x32xf32>
    %69 = arith.addf %67, %68 : vector<8x32xf32>
    %70 = math.tanh %69 : vector<8x32xf32>
    %71 = arith.mulf %66, %70 : vector<8x32xf32>
    %72 = vector.extract_strided_slice %33 {offsets = [16, 0], sizes = [8, 128], strides = [1, 1]} : vector<64x128xf32> to vector<8x128xf32>
    %cst_30 = arith.constant dense<0.000000e+00> : vector<8x128xf32>
    %73 = tpu.matmul %71, %20, %cst_30 {dimension_numbers = #tpu.dot_dimension_numbers<[1], [0], [0], [1], [0, 0, 1, 1], [], []>} : vector<8x32xf32>, vector<32x128xf32>, vector<8x128xf32> -> vector<8x128xf32>
    %74 = arith.addf %72, %73 : vector<8x128xf32>
    %75 = arith.negf %74 : vector<8x128xf32>
    %76 = math.exp %75 : vector<8x128xf32>
    %cst_31 = arith.constant 1.000000e+00 : f32
    %77 = vector.broadcast %cst_31 : f32 to vector<8x128xf32>
    %78 = arith.addf %77, %76 : vector<8x128xf32>
    %79 = arith.divf %77, %78 : vector<8x128xf32>
    %80 = math.tanh %74 : vector<8x128xf32>
    %81 = vector.extract_strided_slice %79 {offsets = [0, 0], sizes = [8, 32], strides = [1, 1]} : vector<8x128xf32> to vector<8x32xf32>
    %82 = vector.extract_strided_slice %79 {offsets = [0, 32], sizes = [8, 32], strides = [1, 1]} : vector<8x128xf32> to vector<8x32xf32>
    %83 = vector.extract_strided_slice %80 {offsets = [0, 64], sizes = [8, 32], strides = [1, 1]} : vector<8x128xf32> to vector<8x32xf32>
    %84 = vector.extract_strided_slice %79 {offsets = [0, 96], sizes = [8, 32], strides = [1, 1]} : vector<8x128xf32> to vector<8x32xf32>
    %85 = arith.mulf %82, %69 : vector<8x32xf32>
    %86 = arith.mulf %81, %83 : vector<8x32xf32>
    %87 = arith.addf %85, %86 : vector<8x32xf32>
    %88 = math.tanh %87 : vector<8x32xf32>
    %89 = arith.mulf %84, %88 : vector<8x32xf32>
    %90 = vector.extract_strided_slice %33 {offsets = [24, 0], sizes = [8, 128], strides = [1, 1]} : vector<64x128xf32> to vector<8x128xf32>
    %cst_32 = arith.constant dense<0.000000e+00> : vector<8x128xf32>
    %91 = tpu.matmul %89, %20, %cst_32 {dimension_numbers = #tpu.dot_dimension_numbers<[1], [0], [0], [1], [0, 0, 1, 1], [], []>} : vector<8x32xf32>, vector<32x128xf32>, vector<8x128xf32> -> vector<8x128xf32>
    %92 = arith.addf %90, %91 : vector<8x128xf32>
    %93 = arith.negf %92 : vector<8x128xf32>
    %94 = math.exp %93 : vector<8x128xf32>
    %cst_33 = arith.constant 1.000000e+00 : f32
    %95 = vector.broadcast %cst_33 : f32 to vector<8x128xf32>
    %96 = arith.addf %95, %94 : vector<8x128xf32>
    %97 = arith.divf %95, %96 : vector<8x128xf32>
    %98 = math.tanh %92 : vector<8x128xf32>
    %99 = vector.extract_strided_slice %97 {offsets = [0, 0], sizes = [8, 32], strides = [1, 1]} : vector<8x128xf32> to vector<8x32xf32>
    %100 = vector.extract_strided_slice %97 {offsets = [0, 32], sizes = [8, 32], strides = [1, 1]} : vector<8x128xf32> to vector<8x32xf32>
    %101 = vector.extract_strided_slice %98 {offsets = [0, 64], sizes = [8, 32], strides = [1, 1]} : vector<8x128xf32> to vector<8x32xf32>
    %102 = vector.extract_strided_slice %97 {offsets = [0, 96], sizes = [8, 32], strides = [1, 1]} : vector<8x128xf32> to vector<8x32xf32>
    %103 = arith.mulf %100, %87 : vector<8x32xf32>
    %104 = arith.mulf %99, %101 : vector<8x32xf32>
    %105 = arith.addf %103, %104 : vector<8x32xf32>
    %106 = math.tanh %105 : vector<8x32xf32>
    %107 = arith.mulf %102, %106 : vector<8x32xf32>
    %108 = vector.extract_strided_slice %33 {offsets = [32, 0], sizes = [8, 128], strides = [1, 1]} : vector<64x128xf32> to vector<8x128xf32>
    %cst_34 = arith.constant dense<0.000000e+00> : vector<8x128xf32>
    %109 = tpu.matmul %107, %20, %cst_34 {dimension_numbers = #tpu.dot_dimension_numbers<[1], [0], [0], [1], [0, 0, 1, 1], [], []>} : vector<8x32xf32>, vector<32x128xf32>, vector<8x128xf32> -> vector<8x128xf32>
    %110 = arith.addf %108, %109 : vector<8x128xf32>
    %111 = arith.negf %110 : vector<8x128xf32>
    %112 = math.exp %111 : vector<8x128xf32>
    %cst_35 = arith.constant 1.000000e+00 : f32
    %113 = vector.broadcast %cst_35 : f32 to vector<8x128xf32>
    %114 = arith.addf %113, %112 : vector<8x128xf32>
    %115 = arith.divf %113, %114 : vector<8x128xf32>
    %116 = math.tanh %110 : vector<8x128xf32>
    %117 = vector.extract_strided_slice %115 {offsets = [0, 0], sizes = [8, 32], strides = [1, 1]} : vector<8x128xf32> to vector<8x32xf32>
    %118 = vector.extract_strided_slice %115 {offsets = [0, 32], sizes = [8, 32], strides = [1, 1]} : vector<8x128xf32> to vector<8x32xf32>
    %119 = vector.extract_strided_slice %116 {offsets = [0, 64], sizes = [8, 32], strides = [1, 1]} : vector<8x128xf32> to vector<8x32xf32>
    %120 = vector.extract_strided_slice %115 {offsets = [0, 96], sizes = [8, 32], strides = [1, 1]} : vector<8x128xf32> to vector<8x32xf32>
    %121 = arith.mulf %118, %105 : vector<8x32xf32>
    %122 = arith.mulf %117, %119 : vector<8x32xf32>
    %123 = arith.addf %121, %122 : vector<8x32xf32>
    %124 = math.tanh %123 : vector<8x32xf32>
    %125 = arith.mulf %120, %124 : vector<8x32xf32>
    %126 = vector.extract_strided_slice %33 {offsets = [40, 0], sizes = [8, 128], strides = [1, 1]} : vector<64x128xf32> to vector<8x128xf32>
    %cst_36 = arith.constant dense<0.000000e+00> : vector<8x128xf32>
    %127 = tpu.matmul %125, %20, %cst_36 {dimension_numbers = #tpu.dot_dimension_numbers<[1], [0], [0], [1], [0, 0, 1, 1], [], []>} : vector<8x32xf32>, vector<32x128xf32>, vector<8x128xf32> -> vector<8x128xf32>
    %128 = arith.addf %126, %127 : vector<8x128xf32>
    %129 = arith.negf %128 : vector<8x128xf32>
    %130 = math.exp %129 : vector<8x128xf32>
    %cst_37 = arith.constant 1.000000e+00 : f32
    %131 = vector.broadcast %cst_37 : f32 to vector<8x128xf32>
    %132 = arith.addf %131, %130 : vector<8x128xf32>
    %133 = arith.divf %131, %132 : vector<8x128xf32>
    %134 = math.tanh %128 : vector<8x128xf32>
    %135 = vector.extract_strided_slice %133 {offsets = [0, 0], sizes = [8, 32], strides = [1, 1]} : vector<8x128xf32> to vector<8x32xf32>
    %136 = vector.extract_strided_slice %133 {offsets = [0, 32], sizes = [8, 32], strides = [1, 1]} : vector<8x128xf32> to vector<8x32xf32>
    %137 = vector.extract_strided_slice %134 {offsets = [0, 64], sizes = [8, 32], strides = [1, 1]} : vector<8x128xf32> to vector<8x32xf32>
    %138 = vector.extract_strided_slice %133 {offsets = [0, 96], sizes = [8, 32], strides = [1, 1]} : vector<8x128xf32> to vector<8x32xf32>
    %139 = arith.mulf %136, %123 : vector<8x32xf32>
    %140 = arith.mulf %135, %137 : vector<8x32xf32>
    %141 = arith.addf %139, %140 : vector<8x32xf32>
    %142 = math.tanh %141 : vector<8x32xf32>
    %143 = arith.mulf %138, %142 : vector<8x32xf32>
    %144 = vector.extract_strided_slice %33 {offsets = [48, 0], sizes = [8, 128], strides = [1, 1]} : vector<64x128xf32> to vector<8x128xf32>
    %cst_38 = arith.constant dense<0.000000e+00> : vector<8x128xf32>
    %145 = tpu.matmul %143, %20, %cst_38 {dimension_numbers = #tpu.dot_dimension_numbers<[1], [0], [0], [1], [0, 0, 1, 1], [], []>} : vector<8x32xf32>, vector<32x128xf32>, vector<8x128xf32> -> vector<8x128xf32>
    %146 = arith.addf %144, %145 : vector<8x128xf32>
    %147 = arith.negf %146 : vector<8x128xf32>
    %148 = math.exp %147 : vector<8x128xf32>
    %cst_39 = arith.constant 1.000000e+00 : f32
    %149 = vector.broadcast %cst_39 : f32 to vector<8x128xf32>
    %150 = arith.addf %149, %148 : vector<8x128xf32>
    %151 = arith.divf %149, %150 : vector<8x128xf32>
    %152 = math.tanh %146 : vector<8x128xf32>
    %153 = vector.extract_strided_slice %151 {offsets = [0, 0], sizes = [8, 32], strides = [1, 1]} : vector<8x128xf32> to vector<8x32xf32>
    %154 = vector.extract_strided_slice %151 {offsets = [0, 32], sizes = [8, 32], strides = [1, 1]} : vector<8x128xf32> to vector<8x32xf32>
    %155 = vector.extract_strided_slice %152 {offsets = [0, 64], sizes = [8, 32], strides = [1, 1]} : vector<8x128xf32> to vector<8x32xf32>
    %156 = vector.extract_strided_slice %151 {offsets = [0, 96], sizes = [8, 32], strides = [1, 1]} : vector<8x128xf32> to vector<8x32xf32>
    %157 = arith.mulf %154, %141 : vector<8x32xf32>
    %158 = arith.mulf %153, %155 : vector<8x32xf32>
    %159 = arith.addf %157, %158 : vector<8x32xf32>
    %160 = math.tanh %159 : vector<8x32xf32>
    %161 = arith.mulf %156, %160 : vector<8x32xf32>
    %162 = vector.extract_strided_slice %33 {offsets = [56, 0], sizes = [8, 128], strides = [1, 1]} : vector<64x128xf32> to vector<8x128xf32>
    %cst_40 = arith.constant dense<0.000000e+00> : vector<8x128xf32>
    %163 = tpu.matmul %161, %20, %cst_40 {dimension_numbers = #tpu.dot_dimension_numbers<[1], [0], [0], [1], [0, 0, 1, 1], [], []>} : vector<8x32xf32>, vector<32x128xf32>, vector<8x128xf32> -> vector<8x128xf32>
    %164 = arith.addf %162, %163 : vector<8x128xf32>
    %165 = arith.negf %164 : vector<8x128xf32>
    %166 = math.exp %165 : vector<8x128xf32>
    %cst_41 = arith.constant 1.000000e+00 : f32
    %167 = vector.broadcast %cst_41 : f32 to vector<8x128xf32>
    %168 = arith.addf %167, %166 : vector<8x128xf32>
    %169 = arith.divf %167, %168 : vector<8x128xf32>
    %170 = math.tanh %164 : vector<8x128xf32>
    %171 = vector.extract_strided_slice %169 {offsets = [0, 0], sizes = [8, 32], strides = [1, 1]} : vector<8x128xf32> to vector<8x32xf32>
    %172 = vector.extract_strided_slice %169 {offsets = [0, 32], sizes = [8, 32], strides = [1, 1]} : vector<8x128xf32> to vector<8x32xf32>
    %173 = vector.extract_strided_slice %170 {offsets = [0, 64], sizes = [8, 32], strides = [1, 1]} : vector<8x128xf32> to vector<8x32xf32>
    %174 = vector.extract_strided_slice %169 {offsets = [0, 96], sizes = [8, 32], strides = [1, 1]} : vector<8x128xf32> to vector<8x32xf32>
    %175 = arith.mulf %172, %159 : vector<8x32xf32>
    %176 = arith.mulf %171, %173 : vector<8x32xf32>
    %177 = arith.addf %175, %176 : vector<8x32xf32>
    %178 = math.tanh %177 : vector<8x32xf32>
    %179 = arith.mulf %174, %178 : vector<8x32xf32>
    %180 = vector.extract_strided_slice %53 {offsets = [0, 0], sizes = [8, 16], strides = [1, 1]} : vector<8x32xf32> to vector<8x16xf32>
    %181 = vector.extract_strided_slice %179 {offsets = [0, 16], sizes = [8, 16], strides = [1, 1]} : vector<8x32xf32> to vector<8x16xf32>
    %182 = tpu.concatenate %180, %181 in 1 : vector<8x16xf32>, vector<8x16xf32> -> vector<8x32xf32>
    %183 = vector.extract_strided_slice %71 {offsets = [0, 0], sizes = [8, 16], strides = [1, 1]} : vector<8x32xf32> to vector<8x16xf32>
    %184 = vector.extract_strided_slice %161 {offsets = [0, 16], sizes = [8, 16], strides = [1, 1]} : vector<8x32xf32> to vector<8x16xf32>
    %185 = tpu.concatenate %183, %184 in 1 : vector<8x16xf32>, vector<8x16xf32> -> vector<8x32xf32>
    %186 = vector.extract_strided_slice %89 {offsets = [0, 0], sizes = [8, 16], strides = [1, 1]} : vector<8x32xf32> to vector<8x16xf32>
    %187 = vector.extract_strided_slice %143 {offsets = [0, 16], sizes = [8, 16], strides = [1, 1]} : vector<8x32xf32> to vector<8x16xf32>
    %188 = tpu.concatenate %186, %187 in 1 : vector<8x16xf32>, vector<8x16xf32> -> vector<8x32xf32>
    %189 = vector.extract_strided_slice %107 {offsets = [0, 0], sizes = [8, 16], strides = [1, 1]} : vector<8x32xf32> to vector<8x16xf32>
    %190 = vector.extract_strided_slice %125 {offsets = [0, 16], sizes = [8, 16], strides = [1, 1]} : vector<8x32xf32> to vector<8x16xf32>
    %191 = tpu.concatenate %189, %190 in 1 : vector<8x16xf32>, vector<8x16xf32> -> vector<8x32xf32>
    %192 = vector.extract_strided_slice %125 {offsets = [0, 0], sizes = [8, 16], strides = [1, 1]} : vector<8x32xf32> to vector<8x16xf32>
    %193 = vector.extract_strided_slice %107 {offsets = [0, 16], sizes = [8, 16], strides = [1, 1]} : vector<8x32xf32> to vector<8x16xf32>
    %194 = tpu.concatenate %192, %193 in 1 : vector<8x16xf32>, vector<8x16xf32> -> vector<8x32xf32>
    %195 = vector.extract_strided_slice %143 {offsets = [0, 0], sizes = [8, 16], strides = [1, 1]} : vector<8x32xf32> to vector<8x16xf32>
    %196 = vector.extract_strided_slice %89 {offsets = [0, 16], sizes = [8, 16], strides = [1, 1]} : vector<8x32xf32> to vector<8x16xf32>
    %197 = tpu.concatenate %195, %196 in 1 : vector<8x16xf32>, vector<8x16xf32> -> vector<8x32xf32>
    %198 = vector.extract_strided_slice %161 {offsets = [0, 0], sizes = [8, 16], strides = [1, 1]} : vector<8x32xf32> to vector<8x16xf32>
    %199 = vector.extract_strided_slice %71 {offsets = [0, 16], sizes = [8, 16], strides = [1, 1]} : vector<8x32xf32> to vector<8x16xf32>
    %200 = tpu.concatenate %198, %199 in 1 : vector<8x16xf32>, vector<8x16xf32> -> vector<8x32xf32>
    %201 = vector.extract_strided_slice %179 {offsets = [0, 0], sizes = [8, 16], strides = [1, 1]} : vector<8x32xf32> to vector<8x16xf32>
    %202 = vector.extract_strided_slice %53 {offsets = [0, 16], sizes = [8, 16], strides = [1, 1]} : vector<8x32xf32> to vector<8x16xf32>
    %203 = tpu.concatenate %201, %202 in 1 : vector<8x16xf32>, vector<8x16xf32> -> vector<8x32xf32>
    %c72 = arith.constant 72 : index
    %c0_42 = arith.constant 0 : index
    %204 = vector.load %arg2[%c72, %c0_42] : memref<216x128xf32, #tpu.memory_space<vmem>>, vector<64x128xf32>
    %c136 = arith.constant 136 : index
    %c0_43 = arith.constant 0 : index
    %205 = vector.load %arg2[%c136, %c0_43] : memref<216x128xf32, #tpu.memory_space<vmem>>, vector<32x128xf32>
    %c168 = arith.constant 168 : index
    %c0_44 = arith.constant 0 : index
    %206 = vector.load %arg2[%c168, %c0_44] : memref<216x128xf32, #tpu.memory_space<vmem>>, vector<1x128xf32>
    %207 = tpu.concatenate %182, %203 in 1 : vector<8x32xf32>, vector<8x32xf32> -> vector<8x64xf32>
    %208 = tpu.concatenate %185, %200 in 1 : vector<8x32xf32>, vector<8x32xf32> -> vector<8x64xf32>
    %209 = tpu.concatenate %188, %197 in 1 : vector<8x32xf32>, vector<8x32xf32> -> vector<8x64xf32>
    %210 = tpu.concatenate %191, %194 in 1 : vector<8x32xf32>, vector<8x32xf32> -> vector<8x64xf32>
    %211 = tpu.concatenate %194, %191 in 1 : vector<8x32xf32>, vector<8x32xf32> -> vector<8x64xf32>
    %212 = tpu.concatenate %197, %188 in 1 : vector<8x32xf32>, vector<8x32xf32> -> vector<8x64xf32>
    %213 = tpu.concatenate %200, %185 in 1 : vector<8x32xf32>, vector<8x32xf32> -> vector<8x64xf32>
    %214 = tpu.concatenate %203, %182 in 1 : vector<8x32xf32>, vector<8x32xf32> -> vector<8x64xf32>
    %215 = tpu.concatenate %207, %208, %209, %210, %211, %212, %213, %214 in 0 : vector<8x64xf32>, vector<8x64xf32>, vector<8x64xf32>, vector<8x64xf32>, vector<8x64xf32>, vector<8x64xf32>, vector<8x64xf32>, vector<8x64xf32> -> vector<64x64xf32>
    %cst_45 = arith.constant dense<0.000000e+00> : vector<64x128xf32>
    %216 = tpu.matmul %215, %204, %cst_45 {dimension_numbers = #tpu.dot_dimension_numbers<[1], [0], [0], [1], [0, 0, 1, 1], [], []>} : vector<64x64xf32>, vector<64x128xf32>, vector<64x128xf32> -> vector<64x128xf32>
    %217 = vector.broadcast %206 : vector<1x128xf32> to vector<64x128xf32>
    %218 = arith.addf %216, %217 : vector<64x128xf32>
    %cst_46 = arith.constant 0.000000e+00 : f32
    %219 = vector.broadcast %cst_46 : f32 to vector<8x32xf32>
    %cst_47 = arith.constant 0.000000e+00 : f32
    %220 = vector.broadcast %cst_47 : f32 to vector<8x32xf32>
    %221 = vector.extract_strided_slice %218 {offsets = [0, 0], sizes = [8, 128], strides = [1, 1]} : vector<64x128xf32> to vector<8x128xf32>
    %cst_48 = arith.constant dense<0.000000e+00> : vector<8x128xf32>
    %222 = tpu.matmul %219, %205, %cst_48 {dimension_numbers = #tpu.dot_dimension_numbers<[1], [0], [0], [1], [0, 0, 1, 1], [], []>} : vector<8x32xf32>, vector<32x128xf32>, vector<8x128xf32> -> vector<8x128xf32>
    %223 = arith.addf %221, %222 : vector<8x128xf32>
    %224 = arith.negf %223 : vector<8x128xf32>
    %225 = math.exp %224 : vector<8x128xf32>
    %cst_49 = arith.constant 1.000000e+00 : f32
    %226 = vector.broadcast %cst_49 : f32 to vector<8x128xf32>
    %227 = arith.addf %226, %225 : vector<8x128xf32>
    %228 = arith.divf %226, %227 : vector<8x128xf32>
    %229 = math.tanh %223 : vector<8x128xf32>
    %230 = vector.extract_strided_slice %228 {offsets = [0, 0], sizes = [8, 32], strides = [1, 1]} : vector<8x128xf32> to vector<8x32xf32>
    %231 = vector.extract_strided_slice %228 {offsets = [0, 32], sizes = [8, 32], strides = [1, 1]} : vector<8x128xf32> to vector<8x32xf32>
    %232 = vector.extract_strided_slice %229 {offsets = [0, 64], sizes = [8, 32], strides = [1, 1]} : vector<8x128xf32> to vector<8x32xf32>
    %233 = vector.extract_strided_slice %228 {offsets = [0, 96], sizes = [8, 32], strides = [1, 1]} : vector<8x128xf32> to vector<8x32xf32>
    %234 = arith.mulf %231, %220 : vector<8x32xf32>
    %235 = arith.mulf %230, %232 : vector<8x32xf32>
    %236 = arith.addf %234, %235 : vector<8x32xf32>
    %237 = math.tanh %236 : vector<8x32xf32>
    %238 = arith.mulf %233, %237 : vector<8x32xf32>
    %c0_i32 = arith.constant 0 : i32
    %239 = vector.broadcast %c0_i32 : i32 to vector<8x1xi32>
    %240 = arith.cmpi eq, %0, %239 : vector<8x1xi32>
    %241 = vector.extract_strided_slice %238 {offsets = [0, 0], sizes = [8, 16], strides = [1, 1]} : vector<8x32xf32> to vector<8x16xf32>
    %242 = vector.shape_cast %240 : vector<8x1xi1> to vector<8x1xi1>
    %243 = vector.broadcast %242 : vector<8x1xi1> to vector<8x16xi1>
    %244 = arith.select %243, %241, %17 : vector<8x16xi1>, vector<8x16xf32>
    %c7_i32 = arith.constant 7 : i32
    %245 = vector.broadcast %c7_i32 : i32 to vector<8x1xi32>
    %246 = arith.cmpi eq, %0, %245 : vector<8x1xi32>
    %247 = vector.extract_strided_slice %238 {offsets = [0, 16], sizes = [8, 16], strides = [1, 1]} : vector<8x32xf32> to vector<8x16xf32>
    %248 = vector.shape_cast %246 : vector<8x1xi1> to vector<8x1xi1>
    %249 = vector.broadcast %248 : vector<8x1xi1> to vector<8x16xi1>
    %250 = arith.select %249, %247, %18 : vector<8x16xi1>, vector<8x16xf32>
    %251 = vector.extract_strided_slice %218 {offsets = [8, 0], sizes = [8, 128], strides = [1, 1]} : vector<64x128xf32> to vector<8x128xf32>
    %cst_50 = arith.constant dense<0.000000e+00> : vector<8x128xf32>
    %252 = tpu.matmul %238, %205, %cst_50 {dimension_numbers = #tpu.dot_dimension_numbers<[1], [0], [0], [1], [0, 0, 1, 1], [], []>} : vector<8x32xf32>, vector<32x128xf32>, vector<8x128xf32> -> vector<8x128xf32>
    %253 = arith.addf %251, %252 : vector<8x128xf32>
    %254 = arith.negf %253 : vector<8x128xf32>
    %255 = math.exp %254 : vector<8x128xf32>
    %cst_51 = arith.constant 1.000000e+00 : f32
    %256 = vector.broadcast %cst_51 : f32 to vector<8x128xf32>
    %257 = arith.addf %256, %255 : vector<8x128xf32>
    %258 = arith.divf %256, %257 : vector<8x128xf32>
    %259 = math.tanh %253 : vector<8x128xf32>
    %260 = vector.extract_strided_slice %258 {offsets = [0, 0], sizes = [8, 32], strides = [1, 1]} : vector<8x128xf32> to vector<8x32xf32>
    %261 = vector.extract_strided_slice %258 {offsets = [0, 32], sizes = [8, 32], strides = [1, 1]} : vector<8x128xf32> to vector<8x32xf32>
    %262 = vector.extract_strided_slice %259 {offsets = [0, 64], sizes = [8, 32], strides = [1, 1]} : vector<8x128xf32> to vector<8x32xf32>
    %263 = vector.extract_strided_slice %258 {offsets = [0, 96], sizes = [8, 32], strides = [1, 1]} : vector<8x128xf32> to vector<8x32xf32>
    %264 = arith.mulf %261, %236 : vector<8x32xf32>
    %265 = arith.mulf %260, %262 : vector<8x32xf32>
    %266 = arith.addf %264, %265 : vector<8x32xf32>
    %267 = math.tanh %266 : vector<8x32xf32>
    %268 = arith.mulf %263, %267 : vector<8x32xf32>
    %c1_i32 = arith.constant 1 : i32
    %269 = vector.broadcast %c1_i32 : i32 to vector<8x1xi32>
    %270 = arith.cmpi eq, %0, %269 : vector<8x1xi32>
    %271 = vector.extract_strided_slice %268 {offsets = [0, 0], sizes = [8, 16], strides = [1, 1]} : vector<8x32xf32> to vector<8x16xf32>
    %272 = vector.shape_cast %270 : vector<8x1xi1> to vector<8x1xi1>
    %273 = vector.broadcast %272 : vector<8x1xi1> to vector<8x16xi1>
    %274 = arith.select %273, %271, %244 : vector<8x16xi1>, vector<8x16xf32>
    %c6_i32 = arith.constant 6 : i32
    %275 = vector.broadcast %c6_i32 : i32 to vector<8x1xi32>
    %276 = arith.cmpi eq, %0, %275 : vector<8x1xi32>
    %277 = vector.extract_strided_slice %268 {offsets = [0, 16], sizes = [8, 16], strides = [1, 1]} : vector<8x32xf32> to vector<8x16xf32>
    %278 = vector.shape_cast %276 : vector<8x1xi1> to vector<8x1xi1>
    %279 = vector.broadcast %278 : vector<8x1xi1> to vector<8x16xi1>
    %280 = arith.select %279, %277, %250 : vector<8x16xi1>, vector<8x16xf32>
    %281 = vector.extract_strided_slice %218 {offsets = [16, 0], sizes = [8, 128], strides = [1, 1]} : vector<64x128xf32> to vector<8x128xf32>
    %cst_52 = arith.constant dense<0.000000e+00> : vector<8x128xf32>
    %282 = tpu.matmul %268, %205, %cst_52 {dimension_numbers = #tpu.dot_dimension_numbers<[1], [0], [0], [1], [0, 0, 1, 1], [], []>} : vector<8x32xf32>, vector<32x128xf32>, vector<8x128xf32> -> vector<8x128xf32>
    %283 = arith.addf %281, %282 : vector<8x128xf32>
    %284 = arith.negf %283 : vector<8x128xf32>
    %285 = math.exp %284 : vector<8x128xf32>
    %cst_53 = arith.constant 1.000000e+00 : f32
    %286 = vector.broadcast %cst_53 : f32 to vector<8x128xf32>
    %287 = arith.addf %286, %285 : vector<8x128xf32>
    %288 = arith.divf %286, %287 : vector<8x128xf32>
    %289 = math.tanh %283 : vector<8x128xf32>
    %290 = vector.extract_strided_slice %288 {offsets = [0, 0], sizes = [8, 32], strides = [1, 1]} : vector<8x128xf32> to vector<8x32xf32>
    %291 = vector.extract_strided_slice %288 {offsets = [0, 32], sizes = [8, 32], strides = [1, 1]} : vector<8x128xf32> to vector<8x32xf32>
    %292 = vector.extract_strided_slice %289 {offsets = [0, 64], sizes = [8, 32], strides = [1, 1]} : vector<8x128xf32> to vector<8x32xf32>
    %293 = vector.extract_strided_slice %288 {offsets = [0, 96], sizes = [8, 32], strides = [1, 1]} : vector<8x128xf32> to vector<8x32xf32>
    %294 = arith.mulf %291, %266 : vector<8x32xf32>
    %295 = arith.mulf %290, %292 : vector<8x32xf32>
    %296 = arith.addf %294, %295 : vector<8x32xf32>
    %297 = math.tanh %296 : vector<8x32xf32>
    %298 = arith.mulf %293, %297 : vector<8x32xf32>
    %c2_i32 = arith.constant 2 : i32
    %299 = vector.broadcast %c2_i32 : i32 to vector<8x1xi32>
    %300 = arith.cmpi eq, %0, %299 : vector<8x1xi32>
    %301 = vector.extract_strided_slice %298 {offsets = [0, 0], sizes = [8, 16], strides = [1, 1]} : vector<8x32xf32> to vector<8x16xf32>
    %302 = vector.shape_cast %300 : vector<8x1xi1> to vector<8x1xi1>
    %303 = vector.broadcast %302 : vector<8x1xi1> to vector<8x16xi1>
    %304 = arith.select %303, %301, %274 : vector<8x16xi1>, vector<8x16xf32>
    %c5_i32 = arith.constant 5 : i32
    %305 = vector.broadcast %c5_i32 : i32 to vector<8x1xi32>
    %306 = arith.cmpi eq, %0, %305 : vector<8x1xi32>
    %307 = vector.extract_strided_slice %298 {offsets = [0, 16], sizes = [8, 16], strides = [1, 1]} : vector<8x32xf32> to vector<8x16xf32>
    %308 = vector.shape_cast %306 : vector<8x1xi1> to vector<8x1xi1>
    %309 = vector.broadcast %308 : vector<8x1xi1> to vector<8x16xi1>
    %310 = arith.select %309, %307, %280 : vector<8x16xi1>, vector<8x16xf32>
    %311 = vector.extract_strided_slice %218 {offsets = [24, 0], sizes = [8, 128], strides = [1, 1]} : vector<64x128xf32> to vector<8x128xf32>
    %cst_54 = arith.constant dense<0.000000e+00> : vector<8x128xf32>
    %312 = tpu.matmul %298, %205, %cst_54 {dimension_numbers = #tpu.dot_dimension_numbers<[1], [0], [0], [1], [0, 0, 1, 1], [], []>} : vector<8x32xf32>, vector<32x128xf32>, vector<8x128xf32> -> vector<8x128xf32>
    %313 = arith.addf %311, %312 : vector<8x128xf32>
    %314 = arith.negf %313 : vector<8x128xf32>
    %315 = math.exp %314 : vector<8x128xf32>
    %cst_55 = arith.constant 1.000000e+00 : f32
    %316 = vector.broadcast %cst_55 : f32 to vector<8x128xf32>
    %317 = arith.addf %316, %315 : vector<8x128xf32>
    %318 = arith.divf %316, %317 : vector<8x128xf32>
    %319 = math.tanh %313 : vector<8x128xf32>
    %320 = vector.extract_strided_slice %318 {offsets = [0, 0], sizes = [8, 32], strides = [1, 1]} : vector<8x128xf32> to vector<8x32xf32>
    %321 = vector.extract_strided_slice %318 {offsets = [0, 32], sizes = [8, 32], strides = [1, 1]} : vector<8x128xf32> to vector<8x32xf32>
    %322 = vector.extract_strided_slice %319 {offsets = [0, 64], sizes = [8, 32], strides = [1, 1]} : vector<8x128xf32> to vector<8x32xf32>
    %323 = vector.extract_strided_slice %318 {offsets = [0, 96], sizes = [8, 32], strides = [1, 1]} : vector<8x128xf32> to vector<8x32xf32>
    %324 = arith.mulf %321, %296 : vector<8x32xf32>
    %325 = arith.mulf %320, %322 : vector<8x32xf32>
    %326 = arith.addf %324, %325 : vector<8x32xf32>
    %327 = math.tanh %326 : vector<8x32xf32>
    %328 = arith.mulf %323, %327 : vector<8x32xf32>
    %c3_i32 = arith.constant 3 : i32
    %329 = vector.broadcast %c3_i32 : i32 to vector<8x1xi32>
    %330 = arith.cmpi eq, %0, %329 : vector<8x1xi32>
    %331 = vector.extract_strided_slice %328 {offsets = [0, 0], sizes = [8, 16], strides = [1, 1]} : vector<8x32xf32> to vector<8x16xf32>
    %332 = vector.shape_cast %330 : vector<8x1xi1> to vector<8x1xi1>
    %333 = vector.broadcast %332 : vector<8x1xi1> to vector<8x16xi1>
    %334 = arith.select %333, %331, %304 : vector<8x16xi1>, vector<8x16xf32>
    %c4_i32 = arith.constant 4 : i32
    %335 = vector.broadcast %c4_i32 : i32 to vector<8x1xi32>
    %336 = arith.cmpi eq, %0, %335 : vector<8x1xi32>
    %337 = vector.extract_strided_slice %328 {offsets = [0, 16], sizes = [8, 16], strides = [1, 1]} : vector<8x32xf32> to vector<8x16xf32>
    %338 = vector.shape_cast %336 : vector<8x1xi1> to vector<8x1xi1>
    %339 = vector.broadcast %338 : vector<8x1xi1> to vector<8x16xi1>
    %340 = arith.select %339, %337, %310 : vector<8x16xi1>, vector<8x16xf32>
    %341 = vector.extract_strided_slice %218 {offsets = [32, 0], sizes = [8, 128], strides = [1, 1]} : vector<64x128xf32> to vector<8x128xf32>
    %cst_56 = arith.constant dense<0.000000e+00> : vector<8x128xf32>
    %342 = tpu.matmul %328, %205, %cst_56 {dimension_numbers = #tpu.dot_dimension_numbers<[1], [0], [0], [1], [0, 0, 1, 1], [], []>} : vector<8x32xf32>, vector<32x128xf32>, vector<8x128xf32> -> vector<8x128xf32>
    %343 = arith.addf %341, %342 : vector<8x128xf32>
    %344 = arith.negf %343 : vector<8x128xf32>
    %345 = math.exp %344 : vector<8x128xf32>
    %cst_57 = arith.constant 1.000000e+00 : f32
    %346 = vector.broadcast %cst_57 : f32 to vector<8x128xf32>
    %347 = arith.addf %346, %345 : vector<8x128xf32>
    %348 = arith.divf %346, %347 : vector<8x128xf32>
    %349 = math.tanh %343 : vector<8x128xf32>
    %350 = vector.extract_strided_slice %348 {offsets = [0, 0], sizes = [8, 32], strides = [1, 1]} : vector<8x128xf32> to vector<8x32xf32>
    %351 = vector.extract_strided_slice %348 {offsets = [0, 32], sizes = [8, 32], strides = [1, 1]} : vector<8x128xf32> to vector<8x32xf32>
    %352 = vector.extract_strided_slice %349 {offsets = [0, 64], sizes = [8, 32], strides = [1, 1]} : vector<8x128xf32> to vector<8x32xf32>
    %353 = vector.extract_strided_slice %348 {offsets = [0, 96], sizes = [8, 32], strides = [1, 1]} : vector<8x128xf32> to vector<8x32xf32>
    %354 = arith.mulf %351, %326 : vector<8x32xf32>
    %355 = arith.mulf %350, %352 : vector<8x32xf32>
    %356 = arith.addf %354, %355 : vector<8x32xf32>
    %357 = math.tanh %356 : vector<8x32xf32>
    %358 = arith.mulf %353, %357 : vector<8x32xf32>
    %c4_i32_58 = arith.constant 4 : i32
    %359 = vector.broadcast %c4_i32_58 : i32 to vector<8x1xi32>
    %360 = arith.cmpi eq, %0, %359 : vector<8x1xi32>
    %361 = vector.extract_strided_slice %358 {offsets = [0, 0], sizes = [8, 16], strides = [1, 1]} : vector<8x32xf32> to vector<8x16xf32>
    %362 = vector.shape_cast %360 : vector<8x1xi1> to vector<8x1xi1>
    %363 = vector.broadcast %362 : vector<8x1xi1> to vector<8x16xi1>
    %364 = arith.select %363, %361, %334 : vector<8x16xi1>, vector<8x16xf32>
    %c3_i32_59 = arith.constant 3 : i32
    %365 = vector.broadcast %c3_i32_59 : i32 to vector<8x1xi32>
    %366 = arith.cmpi eq, %0, %365 : vector<8x1xi32>
    %367 = vector.extract_strided_slice %358 {offsets = [0, 16], sizes = [8, 16], strides = [1, 1]} : vector<8x32xf32> to vector<8x16xf32>
    %368 = vector.shape_cast %366 : vector<8x1xi1> to vector<8x1xi1>
    %369 = vector.broadcast %368 : vector<8x1xi1> to vector<8x16xi1>
    %370 = arith.select %369, %367, %340 : vector<8x16xi1>, vector<8x16xf32>
    %371 = vector.extract_strided_slice %218 {offsets = [40, 0], sizes = [8, 128], strides = [1, 1]} : vector<64x128xf32> to vector<8x128xf32>
    %cst_60 = arith.constant dense<0.000000e+00> : vector<8x128xf32>
    %372 = tpu.matmul %358, %205, %cst_60 {dimension_numbers = #tpu.dot_dimension_numbers<[1], [0], [0], [1], [0, 0, 1, 1], [], []>} : vector<8x32xf32>, vector<32x128xf32>, vector<8x128xf32> -> vector<8x128xf32>
    %373 = arith.addf %371, %372 : vector<8x128xf32>
    %374 = arith.negf %373 : vector<8x128xf32>
    %375 = math.exp %374 : vector<8x128xf32>
    %cst_61 = arith.constant 1.000000e+00 : f32
    %376 = vector.broadcast %cst_61 : f32 to vector<8x128xf32>
    %377 = arith.addf %376, %375 : vector<8x128xf32>
    %378 = arith.divf %376, %377 : vector<8x128xf32>
    %379 = math.tanh %373 : vector<8x128xf32>
    %380 = vector.extract_strided_slice %378 {offsets = [0, 0], sizes = [8, 32], strides = [1, 1]} : vector<8x128xf32> to vector<8x32xf32>
    %381 = vector.extract_strided_slice %378 {offsets = [0, 32], sizes = [8, 32], strides = [1, 1]} : vector<8x128xf32> to vector<8x32xf32>
    %382 = vector.extract_strided_slice %379 {offsets = [0, 64], sizes = [8, 32], strides = [1, 1]} : vector<8x128xf32> to vector<8x32xf32>
    %383 = vector.extract_strided_slice %378 {offsets = [0, 96], sizes = [8, 32], strides = [1, 1]} : vector<8x128xf32> to vector<8x32xf32>
    %384 = arith.mulf %381, %356 : vector<8x32xf32>
    %385 = arith.mulf %380, %382 : vector<8x32xf32>
    %386 = arith.addf %384, %385 : vector<8x32xf32>
    %387 = math.tanh %386 : vector<8x32xf32>
    %388 = arith.mulf %383, %387 : vector<8x32xf32>
    %c5_i32_62 = arith.constant 5 : i32
    %389 = vector.broadcast %c5_i32_62 : i32 to vector<8x1xi32>
    %390 = arith.cmpi eq, %0, %389 : vector<8x1xi32>
    %391 = vector.extract_strided_slice %388 {offsets = [0, 0], sizes = [8, 16], strides = [1, 1]} : vector<8x32xf32> to vector<8x16xf32>
    %392 = vector.shape_cast %390 : vector<8x1xi1> to vector<8x1xi1>
    %393 = vector.broadcast %392 : vector<8x1xi1> to vector<8x16xi1>
    %394 = arith.select %393, %391, %364 : vector<8x16xi1>, vector<8x16xf32>
    %c2_i32_63 = arith.constant 2 : i32
    %395 = vector.broadcast %c2_i32_63 : i32 to vector<8x1xi32>
    %396 = arith.cmpi eq, %0, %395 : vector<8x1xi32>
    %397 = vector.extract_strided_slice %388 {offsets = [0, 16], sizes = [8, 16], strides = [1, 1]} : vector<8x32xf32> to vector<8x16xf32>
    %398 = vector.shape_cast %396 : vector<8x1xi1> to vector<8x1xi1>
    %399 = vector.broadcast %398 : vector<8x1xi1> to vector<8x16xi1>
    %400 = arith.select %399, %397, %370 : vector<8x16xi1>, vector<8x16xf32>
    %401 = vector.extract_strided_slice %218 {offsets = [48, 0], sizes = [8, 128], strides = [1, 1]} : vector<64x128xf32> to vector<8x128xf32>
    %cst_64 = arith.constant dense<0.000000e+00> : vector<8x128xf32>
    %402 = tpu.matmul %388, %205, %cst_64 {dimension_numbers = #tpu.dot_dimension_numbers<[1], [0], [0], [1], [0, 0, 1, 1], [], []>} : vector<8x32xf32>, vector<32x128xf32>, vector<8x128xf32> -> vector<8x128xf32>
    %403 = arith.addf %401, %402 : vector<8x128xf32>
    %404 = arith.negf %403 : vector<8x128xf32>
    %405 = math.exp %404 : vector<8x128xf32>
    %cst_65 = arith.constant 1.000000e+00 : f32
    %406 = vector.broadcast %cst_65 : f32 to vector<8x128xf32>
    %407 = arith.addf %406, %405 : vector<8x128xf32>
    %408 = arith.divf %406, %407 : vector<8x128xf32>
    %409 = math.tanh %403 : vector<8x128xf32>
    %410 = vector.extract_strided_slice %408 {offsets = [0, 0], sizes = [8, 32], strides = [1, 1]} : vector<8x128xf32> to vector<8x32xf32>
    %411 = vector.extract_strided_slice %408 {offsets = [0, 32], sizes = [8, 32], strides = [1, 1]} : vector<8x128xf32> to vector<8x32xf32>
    %412 = vector.extract_strided_slice %409 {offsets = [0, 64], sizes = [8, 32], strides = [1, 1]} : vector<8x128xf32> to vector<8x32xf32>
    %413 = vector.extract_strided_slice %408 {offsets = [0, 96], sizes = [8, 32], strides = [1, 1]} : vector<8x128xf32> to vector<8x32xf32>
    %414 = arith.mulf %411, %386 : vector<8x32xf32>
    %415 = arith.mulf %410, %412 : vector<8x32xf32>
    %416 = arith.addf %414, %415 : vector<8x32xf32>
    %417 = math.tanh %416 : vector<8x32xf32>
    %418 = arith.mulf %413, %417 : vector<8x32xf32>
    %c6_i32_66 = arith.constant 6 : i32
    %419 = vector.broadcast %c6_i32_66 : i32 to vector<8x1xi32>
    %420 = arith.cmpi eq, %0, %419 : vector<8x1xi32>
    %421 = vector.extract_strided_slice %418 {offsets = [0, 0], sizes = [8, 16], strides = [1, 1]} : vector<8x32xf32> to vector<8x16xf32>
    %422 = vector.shape_cast %420 : vector<8x1xi1> to vector<8x1xi1>
    %423 = vector.broadcast %422 : vector<8x1xi1> to vector<8x16xi1>
    %424 = arith.select %423, %421, %394 : vector<8x16xi1>, vector<8x16xf32>
    %c1_i32_67 = arith.constant 1 : i32
    %425 = vector.broadcast %c1_i32_67 : i32 to vector<8x1xi32>
    %426 = arith.cmpi eq, %0, %425 : vector<8x1xi32>
    %427 = vector.extract_strided_slice %418 {offsets = [0, 16], sizes = [8, 16], strides = [1, 1]} : vector<8x32xf32> to vector<8x16xf32>
    %428 = vector.shape_cast %426 : vector<8x1xi1> to vector<8x1xi1>
    %429 = vector.broadcast %428 : vector<8x1xi1> to vector<8x16xi1>
    %430 = arith.select %429, %427, %400 : vector<8x16xi1>, vector<8x16xf32>
    %431 = vector.extract_strided_slice %218 {offsets = [56, 0], sizes = [8, 128], strides = [1, 1]} : vector<64x128xf32> to vector<8x128xf32>
    %cst_68 = arith.constant dense<0.000000e+00> : vector<8x128xf32>
    %432 = tpu.matmul %418, %205, %cst_68 {dimension_numbers = #tpu.dot_dimension_numbers<[1], [0], [0], [1], [0, 0, 1, 1], [], []>} : vector<8x32xf32>, vector<32x128xf32>, vector<8x128xf32> -> vector<8x128xf32>
    %433 = arith.addf %431, %432 : vector<8x128xf32>
    %434 = arith.negf %433 : vector<8x128xf32>
    %435 = math.exp %434 : vector<8x128xf32>
    %cst_69 = arith.constant 1.000000e+00 : f32
    %436 = vector.broadcast %cst_69 : f32 to vector<8x128xf32>
    %437 = arith.addf %436, %435 : vector<8x128xf32>
    %438 = arith.divf %436, %437 : vector<8x128xf32>
    %439 = math.tanh %433 : vector<8x128xf32>
    %440 = vector.extract_strided_slice %438 {offsets = [0, 0], sizes = [8, 32], strides = [1, 1]} : vector<8x128xf32> to vector<8x32xf32>
    %441 = vector.extract_strided_slice %438 {offsets = [0, 32], sizes = [8, 32], strides = [1, 1]} : vector<8x128xf32> to vector<8x32xf32>
    %442 = vector.extract_strided_slice %439 {offsets = [0, 64], sizes = [8, 32], strides = [1, 1]} : vector<8x128xf32> to vector<8x32xf32>
    %443 = vector.extract_strided_slice %438 {offsets = [0, 96], sizes = [8, 32], strides = [1, 1]} : vector<8x128xf32> to vector<8x32xf32>
    %444 = arith.mulf %441, %416 : vector<8x32xf32>
    %445 = arith.mulf %440, %442 : vector<8x32xf32>
    %446 = arith.addf %444, %445 : vector<8x32xf32>
    %447 = math.tanh %446 : vector<8x32xf32>
    %448 = arith.mulf %443, %447 : vector<8x32xf32>
    %c7_i32_70 = arith.constant 7 : i32
    %449 = vector.broadcast %c7_i32_70 : i32 to vector<8x1xi32>
    %450 = arith.cmpi eq, %0, %449 : vector<8x1xi32>
    %451 = vector.extract_strided_slice %448 {offsets = [0, 0], sizes = [8, 16], strides = [1, 1]} : vector<8x32xf32> to vector<8x16xf32>
    %452 = vector.shape_cast %450 : vector<8x1xi1> to vector<8x1xi1>
    %453 = vector.broadcast %452 : vector<8x1xi1> to vector<8x16xi1>
    %454 = arith.select %453, %451, %424 : vector<8x16xi1>, vector<8x16xf32>
    %c0_i32_71 = arith.constant 0 : i32
    %455 = vector.broadcast %c0_i32_71 : i32 to vector<8x1xi32>
    %456 = arith.cmpi eq, %0, %455 : vector<8x1xi32>
    %457 = vector.extract_strided_slice %448 {offsets = [0, 16], sizes = [8, 16], strides = [1, 1]} : vector<8x32xf32> to vector<8x16xf32>
    %458 = vector.shape_cast %456 : vector<8x1xi1> to vector<8x1xi1>
    %459 = vector.broadcast %458 : vector<8x1xi1> to vector<8x16xi1>
    %460 = arith.select %459, %457, %430 : vector<8x16xi1>, vector<8x16xf32>
    %461 = tpu.concatenate %454, %460 in 1 : vector<8x16xf32>, vector<8x16xf32> -> vector<8x32xf32>
    %c176 = arith.constant 176 : index
    %c0_72 = arith.constant 0 : index
    %462 = vector.load %arg2[%c176, %c0_72] : memref<216x128xf32, #tpu.memory_space<vmem>>, vector<32x128xf32>
    %463 = vector.extract_strided_slice %462 {offsets = [0, 0], sizes = [32, 2], strides = [1, 1]} : vector<32x128xf32> to vector<32x2xf32>
    %c208 = arith.constant 208 : index
    %c0_73 = arith.constant 0 : index
    %464 = vector.load %arg2[%c208, %c0_73] : memref<216x128xf32, #tpu.memory_space<vmem>>, vector<1x128xf32>
    %465 = vector.extract_strided_slice %464 {offsets = [0, 0], sizes = [1, 2], strides = [1, 1]} : vector<1x128xf32> to vector<1x2xf32>
    %cst_74 = arith.constant dense<0.000000e+00> : vector<8x2xf32>
    %466 = tpu.matmul %461, %463, %cst_74 {dimension_numbers = #tpu.dot_dimension_numbers<[1], [0], [0], [1], [0, 0, 1, 1], [], []>} : vector<8x32xf32>, vector<32x2xf32>, vector<8x2xf32> -> vector<8x2xf32>
    %467 = vector.broadcast %465 : vector<1x2xf32> to vector<8x2xf32>
    %468 = arith.addf %466, %467 : vector<8x2xf32>
    %469 = arith.negf %468 : vector<8x2xf32>
    %470 = math.exp %469 : vector<8x2xf32>
    %cst_75 = arith.constant 1.000000e+00 : f32
    %471 = vector.broadcast %cst_75 : f32 to vector<8x2xf32>
    %472 = arith.addf %471, %470 : vector<8x2xf32>
    %473 = arith.divf %471, %472 : vector<8x2xf32>
    %c0_76 = arith.constant 0 : index
    %c0_77 = arith.constant 0 : index
    %474 = vector.load %arg3[%c0_76, %c0_77] : memref<8x2xf32, #tpu.memory_space<vmem>>, vector<8x2xf32>
    tpu.vector_store %arg3[%c0_76, %c0_77], %473 {strides = array<i32>} : memref<8x2xf32, #tpu.memory_space<vmem>>, vector<8x2xf32>,
    return
  }
}

</mosaic_0001>

<llo_original>
// kernel: sentiment_lstm_forward.1
$region0: #{sentiment_lstm_forward.1}
  #allocation0 [shape = 'u32[]', space=smem, size = 0x4, offset = 0x4, fixed_abs, tag = 'smem constant byte address 0x4 - core index']
  #allocation1 [shape = 'u32[144,128]{1,0:T(1,128)}', space=vmem, size = 0x12000, scoped, tag = 'internal scratch']
  %s0 = inlined_call_operand.vmem [shape: f32[8,8,16], index: 0, kind: input, shape index: {}]
  %s1 = inlined_call_operand.vmem [shape: s32[8,1], index: 1, kind: input, shape index: {}]
  %s2 = inlined_call_operand.hbm [shape: f32[216,128], index: 2, kind: input, shape index: {}]
  %s3 = inlined_call_operand.vmem [shape: f32[8,2], index: 3, kind: output, shape index: {}]
  %s4 = sld [smem:[#allocation0]]
  $region26: #{sentiment_lstm_forward.1} parent=0
    _
  %s6 = ssub.s32 1, %s4
  %s7 = scalar_select 0, %s6, %s4
  $region1: #{sentiment_lstm_forward.1} parent=0
    #allocation2 [shape = 'u8[110592]{0}', space=vmem, size = 0x1b000, scoped, tag = 'input window, operand 2, single buffered']
    #allocation3 [shape = 's32[1]{0}', space=sflag, size = 0x4, scoped, tag = 'scoped memory for sentiment_lstm_forward.1']
    %8 = vsyncpa [#allocation3], 0
    // Predicated region
    $region2: #{sentiment_lstm_forward.1} parent=1 // pred_check
      _
    $region3: #{sentiment_lstm_forward.1} parent=1 // pred_check_branch
      %10 = sbr.rel (0) target = $region5
    $region4: #{sentiment_lstm_forward.1} parent=1 // pred_region
      _
    $region5: #{sentiment_lstm_forward.1} parent=1 // pred_fallthru
      _
    // Predicated region
    $region6: #{sentiment_lstm_forward.1} parent=1 // pred_check
      _
    $region7: #{sentiment_lstm_forward.1} parent=1 // pred_check_branch
      %12 = sbr.rel (0) target = $region9
    $region8: #{sentiment_lstm_forward.1} parent=1 // pred_region
      _
    $region9: #{sentiment_lstm_forward.1} parent=1 // pred_fallthru
      _
    // Predicated region
    $region10: #{sentiment_lstm_forward.1} parent=1 // pred_check
      _
    $region11: #{sentiment_lstm_forward.1} parent=1 // pred_check_branch
      %14 = sbr.rel (0) target = $region13
    $region12: #{sentiment_lstm_forward.1} parent=1 // pred_region
      %s16 = ssub.s32 3456, 3456
      %17 = vsyncadd [#allocation3], %s16
      %s18 = sshll.u32 [#allocation2], 4
      %s19 = int_to_ptr.vmem [resolvable:$true] %s18
      %24 = dma.hbm_to_vmem [thread:$0]  %s2, 3456, %s19, [#allocation3], 128, 128, 8
    $region13: #{sentiment_lstm_forward.1} parent=1 // pred_fallthru
      _
    // Predicated region
    $region14: #{sentiment_lstm_forward.1} parent=1 // pred_check
      _
    $region15: #{sentiment_lstm_forward.1} parent=1 // pred_check_branch
      %26 = sbr.rel (0) target = $region17
    $region16: #{sentiment_lstm_forward.1} parent=1 // pred_region
      %27 = dma.done [#allocation3], 3456
    $region17: #{sentiment_lstm_forward.1} parent=1 // pred_fallthru
      _
    %v28 = vld [vmem:[%s1] sm:$0xff]
    %v29 = vld [vmem:[%s0] sm:$0xff]
    %s30 = scalar_lea.vmem %s0, 8
    %v31 = vld [vmem:[%s30] sm:$0xff]
    %s32 = scalar_lea.vmem %s0, 16
    %v33 = vld [vmem:[%s32] sm:$0xff]
    %s34 = scalar_lea.vmem %s0, 24
    %v35 = vld [vmem:[%s34] sm:$0xff]
    %s36 = scalar_lea.vmem %s0, 32
    %v37 = vld [vmem:[%s36] sm:$0xff]
    %s38 = scalar_lea.vmem %s0, 40
    %v39 = vld [vmem:[%s38] sm:$0xff]
    %s40 = scalar_lea.vmem %s0, 48
    %v41 = vld [vmem:[%s40] sm:$0xff]
    %s42 = scalar_lea.vmem %s0, 56
    %v43 = vld [vmem:[%s42] sm:$0xff]
    %v44 = vld [vmem:[#allocation2] sm:$0xff]
    %v45 = vld [vmem:[#allocation2 + $0x8] sm:$0xff]
    %v46 = vld [vmem:[#allocation2 + $0x10] sm:$0xff]
    %v47 = vld [vmem:[#allocation2 + $0x18] sm:$0xff]
    %v48 = vld [vmem:[#allocation2 + $0x20] sm:$0xff]
    %v49 = vld [vmem:[#allocation2 + $0x28] sm:$0xff]
    %v50 = vld [vmem:[#allocation2 + $0x30] sm:$0xff]
    %v51 = vld [vmem:[#allocation2 + $0x38] sm:$0xff]
    %v52 = vld [vmem:[#allocation2 + $0x40] sm:$0x1]
    %54 = vrot.lane.b32.xlu0 %v43, 16
    %v55 = vpop.permute.xlu0 %54
    %vm57 = vcmask 130048
    %v58 = vsel %vm57, %v29, %v55
    %60 = vrot.lane.b32.xlu0 %v41, 16
    %v61 = vpop.permute.xlu0 %60
    %v63 = vsel %vm57, %v31, %v61
    %65 = vrot.lane.b32.xlu0 %v39, 16
    %v66 = vpop.permute.xlu0 %65
    %v68 = vsel %vm57, %v33, %v66
    %70 = vrot.lane.b32.xlu0 %v37, 16
    %v71 = vpop.permute.xlu0 %70
    %v73 = vsel %vm57, %v35, %v71
    %75 = vrot.lane.b32.xlu0 %v35, 16
    %v76 = vpop.permute.xlu0 %75
    %v78 = vsel %vm57, %v37, %v76
    %80 = vrot.lane.b32.xlu0 %v33, 16
    %v81 = vpop.permute.xlu0 %80
    %v83 = vsel %vm57, %v39, %v81
    %85 = vrot.lane.b32.xlu0 %v31, 16
    %v86 = vpop.permute.xlu0 %85
    %v88 = vsel %vm57, %v41, %v86
    %90 = vrot.lane.b32.xlu0 %v29, 16
    %v91 = vpop.permute.xlu0 %90
    %v93 = vsel %vm57, %v43, %v91
    %v94 = vlaneseq
    %v95 = vshrl.u32 %v94, 7
    %v96 = vsub.s32 0, %v95
    %v97 = vrot.slane %v52, %v96
    %vm98 = vcmask 261120
    %v100 = vsel %vm98, %v58, 0
    %v103 = vsel %vm98, %v63, 0
    %v106 = vsel %vm98, %v68, 0
    %v109 = vsel %vm98, %v73, 0
    %v112 = vsel %vm98, %v78, 0
    %v115 = vsel %vm98, %v83, 0
    %v118 = vsel %vm98, %v88, 0
    %v121 = vsel %vm98, %v93, 0
    %123 = vmatprep.subr.mxu0 0.0
    %124 = vmatpush1.msra.mxu0 %v44
    %125 = vmatprep.subr.mxu0 0.0
    %126 = vmatpush1.msra.mxu0 %v45
    %127 = vmatprep.subr.mxu0 0.0
    %128 = vmatpush1.msra.mxu0 %v46
    %129 = vmatprep.subr.mxu0 0.0
    %130 = vmatpush1.msra.mxu0 %v47
    %131 = vmatprep.subr.mxu0 0.0
    %132 = vmatpush1.msra.mxu0 0.0
    %133 = vmatprep.subr.mxu0 0.0
    %134 = vmatpush1.msra.mxu0 0.0
    %135 = vmatprep.subr.mxu0 0.0
    %136 = vmatpush1.msra.mxu0 0.0
    %137 = vmatprep.subr.mxu0 0.0
    %138 = vmatpush1.msra.mxu0 0.0
    %139 = vmatprep.subr.mxu0 0.0
    %140 = vmatpush1.msra.mxu0 0.0
    %141 = vmatprep.subr.mxu0 0.0
    %142 = vmatpush1.msra.mxu0 0.0
    %143 = vmatprep.subr.mxu0 0.0
    %144 = vmatpush1.msra.mxu0 0.0
    %145 = vmatprep.subr.mxu0 0.0
    %146 = vmatpush1.msra.mxu0 0.0
    %147 = vmatprep.subr.mxu0 0.0
    %148 = vmatpush1.msra.mxu0 0.0
    %149 = vmatprep.subr.mxu0 0.0
    %150 = vmatpush1.msra.mxu0 0.0
    %151 = vmatprep.subr.mxu0 0.0
    %152 = vmatpush1.msra.mxu0 0.0
    %153 = vmatprep.subr.mxu0 0.0
    %154 = vmatpush1.msra.mxu0 0.0
    %155 = vmatprep.subr.mxu0 0.0
    %156 = vmatpush1.msra.mxu0 0.0
    %157 = vmatprep.subr.mxu0 0.0
    %158 = vmatpush1.msra.mxu0 0.0
    %159 = vmatprep.subr.mxu0 0.0
    %160 = vmatpush1.msra.mxu0 0.0
    %161 = vmatprep.subr.mxu0 0.0
    %162 = vmatpush1.msra.mxu0 0.0
    %163 = vmatprep.subr.mxu0 0.0
    %164 = vmatpush1.msra.mxu0 0.0
    %165 = vmatprep.subr.mxu0 0.0
    %166 = vmatpush1.msra.mxu0 0.0
    %167 = vmatprep.subr.mxu0 0.0
    %168 = vmatpush1.msra.mxu0 0.0
    %169 = vmatprep.subr.mxu0 0.0
    %170 = vmatpush1.msra.mxu0 0.0
    %171 = vmatprep.subr.mxu0 0.0
    %172 = vmatpush1.msra.mxu0 0.0
    %173 = vmatprep.subr.mxu0 0.0
    %174 = vmatpush1.msra.mxu0 0.0
    %175 = vmatprep.subr.mxu0 0.0
    %176 = vmatpush1.msra.mxu0 0.0
    %177 = vmatprep.subr.mxu0 0.0
    %178 = vmatpush1.msra.mxu0 0.0
    %179 = vmatprep.subr.mxu0 0.0
    %180 = vmatpush1.msra.mxu0 0.0
    %181 = vmatprep.subr.mxu0 0.0
    %182 = vmatpush1.msra.mxu0 0.0
    %183 = vmatprep.subr.mxu0 0.0
    %184 = vmatpush1.msra.mxu0 0.0
    %185 = vmatprep.subr.mxu0 0.0
    %186 = vmatpush1.msra.mxu0 0.0
    %187 = vmatprep.mubr.f32.mxu0 0.0
    %188 = vmatmul.mubr.f32.gmra.mrb[0].mxu0 %v100
    %v189 = vpop.f32.mrb[0].mxu0
    %v190 = vadd.f32 %v97, %v189
    %v191 = vpop.f32.mrb[0].mxu0
    %192 = vmatprep.mubr.f32.mxu0 0.0
    %193 = vmatmul.mubr.f32.gmra.mrb[0].mxu0 %v103
    %v194 = vpop.f32.mrb[0].mxu0
    %v195 = vadd.f32 %v97, %v194
    %v196 = vpop.f32.mrb[0].mxu0
    %197 = vmatprep.mubr.f32.mxu0 0.0
    %198 = vmatmul.mubr.f32.gmra.mrb[0].mxu0 %v106
    %v199 = vpop.f32.mrb[0].mxu0
    %v200 = vadd.f32 %v97, %v199
    %v201 = vpop.f32.mrb[0].mxu0
    %202 = vmatprep.mubr.f32.mxu0 0.0
    %203 = vmatmul.mubr.f32.gmra.mrb[0].mxu0 %v109
    %v204 = vpop.f32.mrb[0].mxu0
    %v205 = vadd.f32 %v97, %v204
    %v206 = vpop.f32.mrb[0].mxu0
    %207 = vmatprep.mubr.f32.mxu0 0.0
    %208 = vmatmul.mubr.f32.gmra.mrb[0].mxu0 %v112
    %v209 = vpop.f32.mrb[0].mxu0
    %v210 = vadd.f32 %v97, %v209
    %v211 = vpop.f32.mrb[0].mxu0
    %212 = vmatprep.mubr.f32.mxu0 0.0
    %213 = vmatmul.mubr.f32.gmra.mrb[0].mxu0 %v115
    %v214 = vpop.f32.mrb[0].mxu0
    %v215 = vadd.f32 %v97, %v214
    %v216 = vpop.f32.mrb[0].mxu0
    %217 = vmatprep.mubr.f32.mxu0 0.0
    %218 = vmatmul.mubr.f32.gmra.mrb[0].mxu0 %v118
    %v219 = vpop.f32.mrb[0].mxu0
    %v220 = vadd.f32 %v97, %v219
    %v221 = vpop.f32.mrb[0].mxu0
    %222 = vmatprep.mubr.f32.mxu0 0.0
    %223 = vmatmul.mubr.f32.gmra.mrb[0].mxu0 %v121
    %v224 = vpop.f32.mrb[0].mxu0
    %v225 = vadd.f32 %v97, %v224
    %v226 = vpop.f32.mrb[0].mxu0
    %227 = vdwg.mxu0
    %v229 = vsel %vm98, 0.0, 0
    %231 = vmatprep.subr.mxu0 0.0
    %232 = vmatpush1.msra.mxu0 %v48
    %233 = vmatprep.subr.mxu0 0.0
    %234 = vmatpush1.msra.mxu0 %v49
    %235 = vmatprep.subr.mxu0 0.0
    %236 = vmatpush1.msra.mxu0 %v50
    %237 = vmatprep.subr.mxu0 0.0
    %238 = vmatpush1.msra.mxu0 %v51
    %239 = vmatprep.subr.mxu0 0.0
    %240 = vmatpush1.msra.mxu0 0.0
    %241 = vmatprep.subr.mxu0 0.0
    %242 = vmatpush1.msra.mxu0 0.0
    %243 = vmatprep.subr.mxu0 0.0
    %244 = vmatpush1.msra.mxu0 0.0
    %245 = vmatprep.subr.mxu0 0.0
    %246 = vmatpush1.msra.mxu0 0.0
    %247 = vmatprep.subr.mxu0 0.0
    %248 = vmatpush1.msra.mxu0 0.0
    %249 = vmatprep.subr.mxu0 0.0
    %250 = vmatpush1.msra.mxu0 0.0
    %251 = vmatprep.subr.mxu0 0.0
    %252 = vmatpush1.msra.mxu0 0.0
    %253 = vmatprep.subr.mxu0 0.0
    %254 = vmatpush1.msra.mxu0 0.0
    %255 = vmatprep.subr.mxu0 0.0
    %256 = vmatpush1.msra.mxu0 0.0
    %257 = vmatprep.subr.mxu0 0.0
    %258 = vmatpush1.msra.mxu0 0.0
    %259 = vmatprep.subr.mxu0 0.0
    %260 = vmatpush1.msra.mxu0 0.0
    %261 = vmatprep.subr.mxu0 0.0
    %262 = vmatpush1.msra.mxu0 0.0
    %263 = vmatprep.subr.mxu0 0.0
    %264 = vmatpush1.msra.mxu0 0.0
    %265 = vmatprep.subr.mxu0 0.0
    %266 = vmatpush1.msra.mxu0 0.0
    %267 = vmatprep.subr.mxu0 0.0
    %268 = vmatpush1.msra.mxu0 0.0
    %269 = vmatprep.subr.mxu0 0.0
    %270 = vmatpush1.msra.mxu0 0.0
    %271 = vmatprep.subr.mxu0 0.0
    %272 = vmatpush1.msra.mxu0 0.0
    %273 = vmatprep.subr.mxu0 0.0
    %274 = vmatpush1.msra.mxu0 0.0
    %275 = vmatprep.subr.mxu0 0.0
    %276 = vmatpush1.msra.mxu0 0.0
    %277 = vmatprep.subr.mxu0 0.0
    %278 = vmatpush1.msra.mxu0 0.0
    %279 = vmatprep.subr.mxu0 0.0
    %280 = vmatpush1.msra.mxu0 0.0
    %281 = vmatprep.subr.mxu0 0.0
    %282 = vmatpush1.msra.mxu0 0.0
    %283 = vmatprep.subr.mxu0 0.0
    %284 = vmatpush1.msra.mxu0 0.0
    %285 = vmatprep.subr.mxu0 0.0
    %286 = vmatpush1.msra.mxu0 0.0
    %287 = vmatprep.subr.mxu0 0.0
    %288 = vmatpush1.msra.mxu0 0.0
    %289 = vmatprep.subr.mxu0 0.0
    %290 = vmatpush1.msra.mxu0 0.0
    %291 = vmatprep.subr.mxu0 0.0
    %292 = vmatpush1.msra.mxu0 0.0
    %293 = vmatprep.subr.mxu0 0.0
    %294 = vmatpush1.msra.mxu0 0.0
    %295 = vmatprep.mubr.f32.mxu0 0.0
    %296 = vmatmul.mubr.f32.gmra.mrb[0].mxu0 %v229
    %v297 = vpop.f32.mrb[0].mxu0
    %v298 = vadd.f32 0.0, %v297
    %v299 = vpop.f32.mrb[0].mxu0
    %300 = vdwg.mxu0
    %v301 = vadd.f32 %v190, %v298
    %v302 = vxor.u32 %v301, 2147483648
    %v303 = vmul.f32 %v302, 1.442695
    %v304 = vpow.pop %v303
    %v305 = vadd.f32 %v304, 1.0
    %v306 = vrcp.pop %v305
    %v307 = vmul.f32 1.0, %v306
    %v308 = vtanh.pop %v301
    %v309 = vmul.f32 %v307, 0.0
    %311 = vrot.lane.b32.xlu0 %v308, 64
    %v312 = vpop.permute.xlu0 %311
    %v314 = vmul.f32 %v307, %v312
    %316 = vrot.lane.b32.xlu0 %v314, 32
    %v317 = vpop.permute.xlu0 %316
    %v319 = vadd.f32 %v309, %v317
    %v320 = vtanh.pop %v319
    %322 = vrot.lane.b32.xlu0 %v320, 64
    %v323 = vpop.permute.xlu0 %322
    %v325 = vmul.f32 %v307, %v323
    %327 = vrot.lane.b32.xlu0 %v325, 32
    %v328 = vpop.permute.xlu0 %327
    %v329 = vsel %vm98, %v328, 0
    %331 = vmatprep.subr.mxu0 0.0
    %332 = vmatpush1.msra.mxu0 %v48
    %333 = vmatprep.subr.mxu0 0.0
    %334 = vmatpush1.msra.mxu0 %v49
    %335 = vmatprep.subr.mxu0 0.0
    %336 = vmatpush1.msra.mxu0 %v50
    %337 = vmatprep.subr.mxu0 0.0
    %338 = vmatpush1.msra.mxu0 %v51
    %339 = vmatprep.subr.mxu0 0.0
    %340 = vmatpush1.msra.mxu0 0.0
    %341 = vmatprep.subr.mxu0 0.0
    %342 = vmatpush1.msra.mxu0 0.0
    %343 = vmatprep.subr.mxu0 0.0
    %344 = vmatpush1.msra.mxu0 0.0
    %345 = vmatprep.subr.mxu0 0.0
    %346 = vmatpush1.msra.mxu0 0.0
    %347 = vmatprep.subr.mxu0 0.0
    %348 = vmatpush1.msra.mxu0 0.0
    %349 = vmatprep.subr.mxu0 0.0
    %350 = vmatpush1.msra.mxu0 0.0
    %351 = vmatprep.subr.mxu0 0.0
    %352 = vmatpush1.msra.mxu0 0.0
    %353 = vmatprep.subr.mxu0 0.0
    %354 = vmatpush1.msra.mxu0 0.0
    %355 = vmatprep.subr.mxu0 0.0
    %356 = vmatpush1.msra.mxu0 0.0
    %357 = vmatprep.subr.mxu0 0.0
    %358 = vmatpush1.msra.mxu0 0.0
    %359 = vmatprep.subr.mxu0 0.0
    %360 = vmatpush1.msra.mxu0 0.0
    %361 = vmatprep.subr.mxu0 0.0
    %362 = vmatpush1.msra.mxu0 0.0
    %363 = vmatprep.subr.mxu0 0.0
    %364 = vmatpush1.msra.mxu0 0.0
    %365 = vmatprep.subr.mxu0 0.0
    %366 = vmatpush1.msra.mxu0 0.0
    %367 = vmatprep.subr.mxu0 0.0
    %368 = vmatpush1.msra.mxu0 0.0
    %369 = vmatprep.subr.mxu0 0.0
    %370 = vmatpush1.msra.mxu0 0.0
    %371 = vmatprep.subr.mxu0 0.0
    %372 = vmatpush1.msra.mxu0 0.0
    %373 = vmatprep.subr.mxu0 0.0
    %374 = vmatpush1.msra.mxu0 0.0
    %375 = vmatprep.subr.mxu0 0.0
    %376 = vmatpush1.msra.mxu0 0.0
    %377 = vmatprep.subr.mxu0 0.0
    %378 = vmatpush1.msra.mxu0 0.0
    %379 = vmatprep.subr.mxu0 0.0
    %380 = vmatpush1.msra.mxu0 0.0
    %381 = vmatprep.subr.mxu0 0.0
    %382 = vmatpush1.msra.mxu0 0.0
    %383 = vmatprep.subr.mxu0 0.0
    %384 = vmatpush1.msra.mxu0 0.0
    %385 = vmatprep.subr.mxu0 0.0
    %386 = vmatpush1.msra.mxu0 0.0
    %387 = vmatprep.subr.mxu0 0.0
    %388 = vmatpush1.msra.mxu0 0.0
    %389 = vmatprep.subr.mxu0 0.0
    %390 = vmatpush1.msra.mxu0 0.0
    %391 = vmatprep.subr.mxu0 0.0
    %392 = vmatpush1.msra.mxu0 0.0
    %393 = vmatprep.subr.mxu0 0.0
    %394 = vmatpush1.msra.mxu0 0.0
    %395 = vmatprep.mubr.f32.mxu0 0.0
    %396 = vmatmul.mubr.f32.gmra.mrb[0].mxu0 %v329
    %v397 = vpop.f32.mrb[0].mxu0
    %v398 = vadd.f32 0.0, %v397
    %v399 = vpop.f32.mrb[0].mxu0
    %400 = vdwg.mxu0
    %v401 = vadd.f32 %v195, %v398
    %v402 = vxor.u32 %v401, 2147483648
    %v403 = vmul.f32 %v402, 1.442695
    %v404 = vpow.pop %v403
    %v405 = vadd.f32 %v404, 1.0
    %v406 = vrcp.pop %v405
    %v407 = vmul.f32 1.0, %v406
    %v408 = vtanh.pop %v401
    %v409 = vmul.f32 %v407, %v319
    %411 = vrot.lane.b32.xlu0 %v408, 64
    %v412 = vpop.permute.xlu0 %411
    %v414 = vmul.f32 %v407, %v412
    %416 = vrot.lane.b32.xlu0 %v414, 32
    %v417 = vpop.permute.xlu0 %416
    %v419 = vadd.f32 %v409, %v417
    %v420 = vtanh.pop %v419
    %422 = vrot.lane.b32.xlu0 %v420, 64
    %v423 = vpop.permute.xlu0 %422
    %v425 = vmul.f32 %v407, %v423
    %427 = vrot.lane.b32.xlu0 %v425, 32
    %v428 = vpop.permute.xlu0 %427
    %v429 = vsel %vm98, %v428, 0
    %431 = vmatprep.subr.mxu0 0.0
    %432 = vmatpush1.msra.mxu0 %v48
    %433 = vmatprep.subr.mxu0 0.0
    %434 = vmatpush1.msra.mxu0 %v49
    %435 = vmatprep.subr.mxu0 0.0
    %436 = vmatpush1.msra.mxu0 %v50
    %437 = vmatprep.subr.mxu0 0.0
    %438 = vmatpush1.msra.mxu0 %v51
    %439 = vmatprep.subr.mxu0 0.0
    %440 = vmatpush1.msra.mxu0 0.0
    %441 = vmatprep.subr.mxu0 0.0
    %442 = vmatpush1.msra.mxu0 0.0
    %443 = vmatprep.subr.mxu0 0.0
    %444 = vmatpush1.msra.mxu0 0.0
    %445 = vmatprep.subr.mxu0 0.0
    %446 = vmatpush1.msra.mxu0 0.0
    %447 = vmatprep.subr.mxu0 0.0
    %448 = vmatpush1.msra.mxu0 0.0
    %449 = vmatprep.subr.mxu0 0.0
    %450 = vmatpush1.msra.mxu0 0.0
    %451 = vmatprep.subr.mxu0 0.0
    %452 = vmatpush1.msra.mxu0 0.0
    %453 = vmatprep.subr.mxu0 0.0
    %454 = vmatpush1.msra.mxu0 0.0
    %455 = vmatprep.subr.mxu0 0.0
    %456 = vmatpush1.msra.mxu0 0.0
    %457 = vmatprep.subr.mxu0 0.0
    %458 = vmatpush1.msra.mxu0 0.0
    %459 = vmatprep.subr.mxu0 0.0
    %460 = vmatpush1.msra.mxu0 0.0
    %461 = vmatprep.subr.mxu0 0.0
    %462 = vmatpush1.msra.mxu0 0.0
    %463 = vmatprep.subr.mxu0 0.0
    %464 = vmatpush1.msra.mxu0 0.0
    %465 = vmatprep.subr.mxu0 0.0
    %466 = vmatpush1.msra.mxu0 0.0
    %467 = vmatprep.subr.mxu0 0.0
    %468 = vmatpush1.msra.mxu0 0.0
    %469 = vmatprep.subr.mxu0 0.0
    %470 = vmatpush1.msra.mxu0 0.0
    %471 = vmatprep.subr.mxu0 0.0
    %472 = vmatpush1.msra.mxu0 0.0
    %473 = vmatprep.subr.mxu0 0.0
    %474 = vmatpush1.msra.mxu0 0.0
    %475 = vmatprep.subr.mxu0 0.0
    %476 = vmatpush1.msra.mxu0 0.0
    %477 = vmatprep.subr.mxu0 0.0
    %478 = vmatpush1.msra.mxu0 0.0
    %479 = vmatprep.subr.mxu0 0.0
    %480 = vmatpush1.msra.mxu0 0.0
    %481 = vmatprep.subr.mxu0 0.0
    %482 = vmatpush1.msra.mxu0 0.0
    %483 = vmatprep.subr.mxu0 0.0
    %484 = vmatpush1.msra.mxu0 0.0
    %485 = vmatprep.subr.mxu0 0.0
    %486 = vmatpush1.msra.mxu0 0.0
    %487 = vmatprep.subr.mxu0 0.0
    %488 = vmatpush1.msra.mxu0 0.0
    %489 = vmatprep.subr.mxu0 0.0
    %490 = vmatpush1.msra.mxu0 0.0
    %491 = vmatprep.subr.mxu0 0.0
    %492 = vmatpush1.msra.mxu0 0.0
    %493 = vmatprep.subr.mxu0 0.0
    %494 = vmatpush1.msra.mxu0 0.0
    %495 = vmatprep.mubr.f32.mxu0 0.0
    %496 = vmatmul.mubr.f32.gmra.mrb[0].mxu0 %v429
    %v497 = vpop.f32.mrb[0].mxu0
    %v498 = vadd.f32 0.0, %v497
    %v499 = vpop.f32.mrb[0].mxu0
    %500 = vdwg.mxu0
    %v501 = vadd.f32 %v200, %v498
    %v502 = vxor.u32 %v501, 2147483648
    %v503 = vmul.f32 %v502, 1.442695
    %v504 = vpow.pop %v503
    %v505 = vadd.f32 %v504, 1.0
    %v506 = vrcp.pop %v505
    %v507 = vmul.f32 1.0, %v506
    %v508 = vtanh.pop %v501
    %v509 = vmul.f32 %v507, %v419
    %511 = vrot.lane.b32.xlu0 %v508, 64
    %v512 = vpop.permute.xlu0 %511
    %v514 = vmul.f32 %v507, %v512
    %516 = vrot.lane.b32.xlu0 %v514, 32
    %v517 = vpop.permute.xlu0 %516
    %v519 = vadd.f32 %v509, %v517
    %v520 = vtanh.pop %v519
    %522 = vrot.lane.b32.xlu0 %v520, 64
    %v523 = vpop.permute.xlu0 %522
    %v525 = vmul.f32 %v507, %v523
    %527 = vrot.lane.b32.xlu0 %v525, 32
    %v528 = vpop.permute.xlu0 %527
    %v529 = vsel %vm98, %v528, 0
    %531 = vmatprep.subr.mxu0 0.0
    %532 = vmatpush1.msra.mxu0 %v48
    %533 = vmatprep.subr.mxu0 0.0
    %534 = vmatpush1.msra.mxu0 %v49
    %535 = vmatprep.subr.mxu0 0.0
    %536 = vmatpush1.msra.mxu0 %v50
    %537 = vmatprep.subr.mxu0 0.0
    %538 = vmatpush1.msra.mxu0 %v51
    %539 = vmatprep.subr.mxu0 0.0
    %540 = vmatpush1.msra.mxu0 0.0
    %541 = vmatprep.subr.mxu0 0.0
    %542 = vmatpush1.msra.mxu0 0.0
    %543 = vmatprep.subr.mxu0 0.0
    %544 = vmatpush1.msra.mxu0 0.0
    %545 = vmatprep.subr.mxu0 0.0
    %546 = vmatpush1.msra.mxu0 0.0
    %547 = vmatprep.subr.mxu0 0.0
    %548 = vmatpush1.msra.mxu0 0.0
    %549 = vmatprep.subr.mxu0 0.0
    %550 = vmatpush1.msra.mxu0 0.0
    %551 = vmatprep.subr.mxu0 0.0
    %552 = vmatpush1.msra.mxu0 0.0
    %553 = vmatprep.subr.mxu0 0.0
    %554 = vmatpush1.msra.mxu0 0.0
    %555 = vmatprep.subr.mxu0 0.0
    %556 = vmatpush1.msra.mxu0 0.0
    %557 = vmatprep.subr.mxu0 0.0
    %558 = vmatpush1.msra.mxu0 0.0
    %559 = vmatprep.subr.mxu0 0.0
    %560 = vmatpush1.msra.mxu0 0.0
    %561 = vmatprep.subr.mxu0 0.0
    %562 = vmatpush1.msra.mxu0 0.0
    %563 = vmatprep.subr.mxu0 0.0
    %564 = vmatpush1.msra.mxu0 0.0
    %565 = vmatprep.subr.mxu0 0.0
    %566 = vmatpush1.msra.mxu0 0.0
    %567 = vmatprep.subr.mxu0 0.0
    %568 = vmatpush1.msra.mxu0 0.0
    %569 = vmatprep.subr.mxu0 0.0
    %570 = vmatpush1.msra.mxu0 0.0
    %571 = vmatprep.subr.mxu0 0.0
    %572 = vmatpush1.msra.mxu0 0.0
    %573 = vmatprep.subr.mxu0 0.0
    %574 = vmatpush1.msra.mxu0 0.0
    %575 = vmatprep.subr.mxu0 0.0
    %576 = vmatpush1.msra.mxu0 0.0
    %577 = vmatprep.subr.mxu0 0.0
    %578 = vmatpush1.msra.mxu0 0.0
    %579 = vmatprep.subr.mxu0 0.0
    %580 = vmatpush1.msra.mxu0 0.0
    %581 = vmatprep.subr.mxu0 0.0
    %582 = vmatpush1.msra.mxu0 0.0
    %583 = vmatprep.subr.mxu0 0.0
    %584 = vmatpush1.msra.mxu0 0.0
    %585 = vmatprep.subr.mxu0 0.0
    %586 = vmatpush1.msra.mxu0 0.0
    %587 = vmatprep.subr.mxu0 0.0
    %588 = vmatpush1.msra.mxu0 0.0
    %589 = vmatprep.subr.mxu0 0.0
    %590 = vmatpush1.msra.mxu0 0.0
    %591 = vmatprep.subr.mxu0 0.0
    %592 = vmatpush1.msra.mxu0 0.0
    %593 = vmatprep.subr.mxu0 0.0
    %594 = vmatpush1.msra.mxu0 0.0
    %595 = vmatprep.mubr.f32.mxu0 0.0
    %596 = vmatmul.mubr.f32.gmra.mrb[0].mxu0 %v529
    %v597 = vpop.f32.mrb[0].mxu0
    %v598 = vadd.f32 0.0, %v597
    %v599 = vpop.f32.mrb[0].mxu0
    %600 = vdwg.mxu0
    %v601 = vadd.f32 %v205, %v598
    %v602 = vxor.u32 %v601, 2147483648
    %v603 = vmul.f32 %v602, 1.442695
    %v604 = vpow.pop %v603
    %v605 = vadd.f32 %v604, 1.0
    %v606 = vrcp.pop %v605
    %v607 = vmul.f32 1.0, %v606
    %v608 = vtanh.pop %v601
    %v609 = vmul.f32 %v607, %v519
    %611 = vrot.lane.b32.xlu0 %v608, 64
    %v612 = vpop.permute.xlu0 %611
    %v614 = vmul.f32 %v607, %v612
    %616 = vrot.lane.b32.xlu0 %v614, 32
    %v617 = vpop.permute.xlu0 %616
    %v619 = vadd.f32 %v609, %v617
    %v620 = vtanh.pop %v619
    %622 = vrot.lane.b32.xlu0 %v620, 64
    %v623 = vpop.permute.xlu0 %622
    %v625 = vmul.f32 %v607, %v623
    %627 = vrot.lane.b32.xlu0 %v625, 32
    %v628 = vpop.permute.xlu0 %627
    %v629 = vsel %vm98, %v628, 0
    %631 = vmatprep.subr.mxu0 0.0
    %632 = vmatpush1.msra.mxu0 %v48
    %633 = vmatprep.subr.mxu0 0.0
    %634 = vmatpush1.msra.mxu0 %v49
    %635 = vmatprep.subr.mxu0 0.0
    %636 = vmatpush1.msra.mxu0 %v50
    %637 = vmatprep.subr.mxu0 0.0
    %638 = vmatpush1.msra.mxu0 %v51
    %639 = vmatprep.subr.mxu0 0.0
    %640 = vmatpush1.msra.mxu0 0.0
    %641 = vmatprep.subr.mxu0 0.0
    %642 = vmatpush1.msra.mxu0 0.0
    %643 = vmatprep.subr.mxu0 0.0
    %644 = vmatpush1.msra.mxu0 0.0
    %645 = vmatprep.subr.mxu0 0.0
    %646 = vmatpush1.msra.mxu0 0.0
    %647 = vmatprep.subr.mxu0 0.0
    %648 = vmatpush1.msra.mxu0 0.0
    %649 = vmatprep.subr.mxu0 0.0
    %650 = vmatpush1.msra.mxu0 0.0
    %651 = vmatprep.subr.mxu0 0.0
    %652 = vmatpush1.msra.mxu0 0.0
    %653 = vmatprep.subr.mxu0 0.0
    %654 = vmatpush1.msra.mxu0 0.0
    %655 = vmatprep.subr.mxu0 0.0
    %656 = vmatpush1.msra.mxu0 0.0
    %657 = vmatprep.subr.mxu0 0.0
    %658 = vmatpush1.msra.mxu0 0.0
    %659 = vmatprep.subr.mxu0 0.0
    %660 = vmatpush1.msra.mxu0 0.0
    %661 = vmatprep.subr.mxu0 0.0
    %662 = vmatpush1.msra.mxu0 0.0
    %663 = vmatprep.subr.mxu0 0.0
    %664 = vmatpush1.msra.mxu0 0.0
    %665 = vmatprep.subr.mxu0 0.0
    %666 = vmatpush1.msra.mxu0 0.0
    %667 = vmatprep.subr.mxu0 0.0
    %668 = vmatpush1.msra.mxu0 0.0
    %669 = vmatprep.subr.mxu0 0.0
    %670 = vmatpush1.msra.mxu0 0.0
    %671 = vmatprep.subr.mxu0 0.0
    %672 = vmatpush1.msra.mxu0 0.0
    %673 = vmatprep.subr.mxu0 0.0
    %674 = vmatpush1.msra.mxu0 0.0
    %675 = vmatprep.subr.mxu0 0.0
    %676 = vmatpush1.msra.mxu0 0.0
    %677 = vmatprep.subr.mxu0 0.0
    %678 = vmatpush1.msra.mxu0 0.0
    %679 = vmatprep.subr.mxu0 0.0
    %680 = vmatpush1.msra.mxu0 0.0
    %681 = vmatprep.subr.mxu0 0.0
    %682 = vmatpush1.msra.mxu0 0.0
    %683 = vmatprep.subr.mxu0 0.0
    %684 = vmatpush1.msra.mxu0 0.0
    %685 = vmatprep.subr.mxu0 0.0
    %686 = vmatpush1.msra.mxu0 0.0
    %687 = vmatprep.subr.mxu0 0.0
    %688 = vmatpush1.msra.mxu0 0.0
    %689 = vmatprep.subr.mxu0 0.0
    %690 = vmatpush1.msra.mxu0 0.0
    %691 = vmatprep.subr.mxu0 0.0
    %692 = vmatpush1.msra.mxu0 0.0
    %693 = vmatprep.subr.mxu0 0.0
    %694 = vmatpush1.msra.mxu0 0.0
    %695 = vmatprep.mubr.f32.mxu0 0.0
    %696 = vmatmul.mubr.f32.gmra.mrb[0].mxu0 %v629
    %v697 = vpop.f32.mrb[0].mxu0
    %v698 = vadd.f32 0.0, %v697
    %v699 = vpop.f32.mrb[0].mxu0
    %700 = vdwg.mxu0
    %v701 = vadd.f32 %v210, %v698
    %v702 = vxor.u32 %v701, 2147483648
    %v703 = vmul.f32 %v702, 1.442695
    %v704 = vpow.pop %v703
    %v705 = vadd.f32 %v704, 1.0
    %v706 = vrcp.pop %v705
    %v707 = vmul.f32 1.0, %v706
    %v708 = vtanh.pop %v701
    %v709 = vmul.f32 %v707, %v619
    %711 = vrot.lane.b32.xlu0 %v708, 64
    %v712 = vpop.permute.xlu0 %711
    %v714 = vmul.f32 %v707, %v712
    %716 = vrot.lane.b32.xlu0 %v714, 32
    %v717 = vpop.permute.xlu0 %716
    %v719 = vadd.f32 %v709, %v717
    %v720 = vtanh.pop %v719
    %722 = vrot.lane.b32.xlu0 %v720, 64
    %v723 = vpop.permute.xlu0 %722
    %v725 = vmul.f32 %v707, %v723
    %727 = vrot.lane.b32.xlu0 %v725, 32
    %v728 = vpop.permute.xlu0 %727
    %v729 = vsel %vm98, %v728, 0
    %731 = vmatprep.subr.mxu0 0.0
    %732 = vmatpush1.msra.mxu0 %v48
    %733 = vmatprep.subr.mxu0 0.0
    %734 = vmatpush1.msra.mxu0 %v49
    %735 = vmatprep.subr.mxu0 0.0
    %736 = vmatpush1.msra.mxu0 %v50
    %737 = vmatprep.subr.mxu0 0.0
    %738 = vmatpush1.msra.mxu0 %v51
    %739 = vmatprep.subr.mxu0 0.0
    %740 = vmatpush1.msra.mxu0 0.0
    %741 = vmatprep.subr.mxu0 0.0
    %742 = vmatpush1.msra.mxu0 0.0
    %743 = vmatprep.subr.mxu0 0.0
    %744 = vmatpush1.msra.mxu0 0.0
    %745 = vmatprep.subr.mxu0 0.0
    %746 = vmatpush1.msra.mxu0 0.0
    %747 = vmatprep.subr.mxu0 0.0
    %748 = vmatpush1.msra.mxu0 0.0
    %749 = vmatprep.subr.mxu0 0.0
    %750 = vmatpush1.msra.mxu0 0.0
    %751 = vmatprep.subr.mxu0 0.0
    %752 = vmatpush1.msra.mxu0 0.0
    %753 = vmatprep.subr.mxu0 0.0
    %754 = vmatpush1.msra.mxu0 0.0
    %755 = vmatprep.subr.mxu0 0.0
    %756 = vmatpush1.msra.mxu0 0.0
    %757 = vmatprep.subr.mxu0 0.0
    %758 = vmatpush1.msra.mxu0 0.0
    %759 = vmatprep.subr.mxu0 0.0
    %760 = vmatpush1.msra.mxu0 0.0
    %761 = vmatprep.subr.mxu0 0.0
    %762 = vmatpush1.msra.mxu0 0.0
    %763 = vmatprep.subr.mxu0 0.0
    %764 = vmatpush1.msra.mxu0 0.0
    %765 = vmatprep.subr.mxu0 0.0
    %766 = vmatpush1.msra.mxu0 0.0
    %767 = vmatprep.subr.mxu0 0.0
    %768 = vmatpush1.msra.mxu0 0.0
    %769 = vmatprep.subr.mxu0 0.0
    %770 = vmatpush1.msra.mxu0 0.0
    %771 = vmatprep.subr.mxu0 0.0
    %772 = vmatpush1.msra.mxu0 0.0
    %773 = vmatprep.subr.mxu0 0.0
    %774 = vmatpush1.msra.mxu0 0.0
    %775 = vmatprep.subr.mxu0 0.0
    %776 = vmatpush1.msra.mxu0 0.0
    %777 = vmatprep.subr.mxu0 0.0
    %778 = vmatpush1.msra.mxu0 0.0
    %779 = vmatprep.subr.mxu0 0.0
    %780 = vmatpush1.msra.mxu0 0.0
    %781 = vmatprep.subr.mxu0 0.0
    %782 = vmatpush1.msra.mxu0 0.0
    %783 = vmatprep.subr.mxu0 0.0
    %784 = vmatpush1.msra.mxu0 0.0
    %785 = vmatprep.subr.mxu0 0.0
    %786 = vmatpush1.msra.mxu0 0.0
    %787 = vmatprep.subr.mxu0 0.0
    %788 = vmatpush1.msra.mxu0 0.0
    %789 = vmatprep.subr.mxu0 0.0
    %790 = vmatpush1.msra.mxu0 0.0
    %791 = vmatprep.subr.mxu0 0.0
    %792 = vmatpush1.msra.mxu0 0.0
    %793 = vmatprep.subr.mxu0 0.0
    %794 = vmatpush1.msra.mxu0 0.0
    %795 = vmatprep.mubr.f32.mxu0 0.0
    %796 = vmatmul.mubr.f32.gmra.mrb[0].mxu0 %v729
    %v797 = vpop.f32.mrb[0].mxu0
    %v798 = vadd.f32 0.0, %v797
    %v799 = vpop.f32.mrb[0].mxu0
    %800 = vdwg.mxu0
    %v801 = vadd.f32 %v215, %v798
    %v802 = vxor.u32 %v801, 2147483648
    %v803 = vmul.f32 %v802, 1.442695
    %v804 = vpow.pop %v803
    %v805 = vadd.f32 %v804, 1.0
    %v806 = vrcp.pop %v805
    %v807 = vmul.f32 1.0, %v806
    %v808 = vtanh.pop %v801
    %v809 = vmul.f32 %v807, %v719
    %811 = vrot.lane.b32.xlu0 %v808, 64
    %v812 = vpop.permute.xlu0 %811
    %v814 = vmul.f32 %v807, %v812
    %816 = vrot.lane.b32.xlu0 %v814, 32
    %v817 = vpop.permute.xlu0 %816
    %v819 = vadd.f32 %v809, %v817
    %v820 = vtanh.pop %v819
    %822 = vrot.lane.b32.xlu0 %v820, 64
    %v823 = vpop.permute.xlu0 %822
    %v825 = vmul.f32 %v807, %v823
    %827 = vrot.lane.b32.xlu0 %v825, 32
    %v828 = vpop.permute.xlu0 %827
    %v829 = vsel %vm98, %v828, 0
    %831 = vmatprep.subr.mxu0 0.0
    %832 = vmatpush1.msra.mxu0 %v48
    %833 = vmatprep.subr.mxu0 0.0
    %834 = vmatpush1.msra.mxu0 %v49
    %835 = vmatprep.subr.mxu0 0.0
    %836 = vmatpush1.msra.mxu0 %v50
    %837 = vmatprep.subr.mxu0 0.0
    %838 = vmatpush1.msra.mxu0 %v51
    %839 = vmatprep.subr.mxu0 0.0
    %840 = vmatpush1.msra.mxu0 0.0
    %841 = vmatprep.subr.mxu0 0.0
    %842 = vmatpush1.msra.mxu0 0.0
    %843 = vmatprep.subr.mxu0 0.0
    %844 = vmatpush1.msra.mxu0 0.0
    %845 = vmatprep.subr.mxu0 0.0
    %846 = vmatpush1.msra.mxu0 0.0
    %847 = vmatprep.subr.mxu0 0.0
    %848 = vmatpush1.msra.mxu0 0.0
    %849 = vmatprep.subr.mxu0 0.0
    %850 = vmatpush1.msra.mxu0 0.0
    %851 = vmatprep.subr.mxu0 0.0
    %852 = vmatpush1.msra.mxu0 0.0
    %853 = vmatprep.subr.mxu0 0.0
    %854 = vmatpush1.msra.mxu0 0.0
    %855 = vmatprep.subr.mxu0 0.0
    %856 = vmatpush1.msra.mxu0 0.0
    %857 = vmatprep.subr.mxu0 0.0
    %858 = vmatpush1.msra.mxu0 0.0
    %859 = vmatprep.subr.mxu0 0.0
    %860 = vmatpush1.msra.mxu0 0.0
    %861 = vmatprep.subr.mxu0 0.0
    %862 = vmatpush1.msra.mxu0 0.0
    %863 = vmatprep.subr.mxu0 0.0
    %864 = vmatpush1.msra.mxu0 0.0
    %865 = vmatprep.subr.mxu0 0.0
    %866 = vmatpush1.msra.mxu0 0.0
    %867 = vmatprep.subr.mxu0 0.0
    %868 = vmatpush1.msra.mxu0 0.0
    %869 = vmatprep.subr.mxu0 0.0
    %870 = vmatpush1.msra.mxu0 0.0
    %871 = vmatprep.subr.mxu0 0.0
    %872 = vmatpush1.msra.mxu0 0.0
    %873 = vmatprep.subr.mxu0 0.0
    %874 = vmatpush1.msra.mxu0 0.0
    %875 = vmatprep.subr.mxu0 0.0
    %876 = vmatpush1.msra.mxu0 0.0
    %877 = vmatprep.subr.mxu0 0.0
    %878 = vmatpush1.msra.mxu0 0.0
    %879 = vmatprep.subr.mxu0 0.0
    %880 = vmatpush1.msra.mxu0 0.0
    %881 = vmatprep.subr.mxu0 0.0
    %882 = vmatpush1.msra.mxu0 0.0
    %883 = vmatprep.subr.mxu0 0.0
    %884 = vmatpush1.msra.mxu0 0.0
    %885 = vmatprep.subr.mxu0 0.0
    %886 = vmatpush1.msra.mxu0 0.0
    %887 = vmatprep.subr.mxu0 0.0
    %888 = vmatpush1.msra.mxu0 0.0
    %889 = vmatprep.subr.mxu0 0.0
    %890 = vmatpush1.msra.mxu0 0.0
    %891 = vmatprep.subr.mxu0 0.0
    %892 = vmatpush1.msra.mxu0 0.0
    %893 = vmatprep.subr.mxu0 0.0
    %894 = vmatpush1.msra.mxu0 0.0
    %895 = vmatprep.mubr.f32.mxu0 0.0
    %896 = vmatmul.mubr.f32.gmra.mrb[0].mxu0 %v829
    %v897 = vpop.f32.mrb[0].mxu0
    %v898 = vadd.f32 0.0, %v897
    %v899 = vpop.f32.mrb[0].mxu0
    %900 = vdwg.mxu0
    %v901 = vadd.f32 %v220, %v898
    %v902 = vxor.u32 %v901, 2147483648
    %v903 = vmul.f32 %v902, 1.442695
    %v904 = vpow.pop %v903
    %v905 = vadd.f32 %v904, 1.0
    %v906 = vrcp.pop %v905
    %v907 = vmul.f32 1.0, %v906
    %v908 = vtanh.pop %v901
    %v909 = vmul.f32 %v907, %v819
    %911 = vrot.lane.b32.xlu0 %v908, 64
    %v912 = vpop.permute.xlu0 %911
    %v914 = vmul.f32 %v907, %v912
    %916 = vrot.lane.b32.xlu0 %v914, 32
    %v917 = vpop.permute.xlu0 %916
    %v919 = vadd.f32 %v909, %v917
    %v920 = vtanh.pop %v919
    %922 = vrot.lane.b32.xlu0 %v920, 64
    %v923 = vpop.permute.xlu0 %922
    %v925 = vmul.f32 %v907, %v923
    %927 = vrot.lane.b32.xlu0 %v925, 32
    %v928 = vpop.permute.xlu0 %927
    %v929 = vsel %vm98, %v928, 0
    %931 = vmatprep.subr.mxu0 0.0
    %932 = vmatpush1.msra.mxu0 %v48
    %933 = vmatprep.subr.mxu0 0.0
    %934 = vmatpush1.msra.mxu0 %v49
    %935 = vmatprep.subr.mxu0 0.0
    %936 = vmatpush1.msra.mxu0 %v50
    %937 = vmatprep.subr.mxu0 0.0
    %938 = vmatpush1.msra.mxu0 %v51
    %939 = vmatprep.subr.mxu0 0.0
    %940 = vmatpush1.msra.mxu0 0.0
    %941 = vmatprep.subr.mxu0 0.0
    %942 = vmatpush1.msra.mxu0 0.0
    %943 = vmatprep.subr.mxu0 0.0
    %944 = vmatpush1.msra.mxu0 0.0
    %945 = vmatprep.subr.mxu0 0.0
    %946 = vmatpush1.msra.mxu0 0.0
    %947 = vmatprep.subr.mxu0 0.0
    %948 = vmatpush1.msra.mxu0 0.0
    %949 = vmatprep.subr.mxu0 0.0
    %950 = vmatpush1.msra.mxu0 0.0
    %951 = vmatprep.subr.mxu0 0.0
    %952 = vmatpush1.msra.mxu0 0.0
    %953 = vmatprep.subr.mxu0 0.0
    %954 = vmatpush1.msra.mxu0 0.0
    %955 = vmatprep.subr.mxu0 0.0
    %956 = vmatpush1.msra.mxu0 0.0
    %957 = vmatprep.subr.mxu0 0.0
    %958 = vmatpush1.msra.mxu0 0.0
    %959 = vmatprep.subr.mxu0 0.0
    %960 = vmatpush1.msra.mxu0 0.0
    %961 = vmatprep.subr.mxu0 0.0
    %962 = vmatpush1.msra.mxu0 0.0
    %963 = vmatprep.subr.mxu0 0.0
    %964 = vmatpush1.msra.mxu0 0.0
    %965 = vmatprep.subr.mxu0 0.0
    %966 = vmatpush1.msra.mxu0 0.0
    %967 = vmatprep.subr.mxu0 0.0
    %968 = vmatpush1.msra.mxu0 0.0
    %969 = vmatprep.subr.mxu0 0.0
    %970 = vmatpush1.msra.mxu0 0.0
    %971 = vmatprep.subr.mxu0 0.0
    %972 = vmatpush1.msra.mxu0 0.0
    %973 = vmatprep.subr.mxu0 0.0
    %974 = vmatpush1.msra.mxu0 0.0
    %975 = vmatprep.subr.mxu0 0.0
    %976 = vmatpush1.msra.mxu0 0.0
    %977 = vmatprep.subr.mxu0 0.0
    %978 = vmatpush1.msra.mxu0 0.0
    %979 = vmatprep.subr.mxu0 0.0
    %980 = vmatpush1.msra.mxu0 0.0
    %981 = vmatprep.subr.mxu0 0.0
    %982 = vmatpush1.msra.mxu0 0.0
    %983 = vmatprep.subr.mxu0 0.0
    %984 = vmatpush1.msra.mxu0 0.0
    %985 = vmatprep.subr.mxu0 0.0
    %986 = vmatpush1.msra.mxu0 0.0
    %987 = vmatprep.subr.mxu0 0.0
    %988 = vmatpush1.msra.mxu0 0.0
    %989 = vmatprep.subr.mxu0 0.0
    %990 = vmatpush1.msra.mxu0 0.0
    %991 = vmatprep.subr.mxu0 0.0
    %992 = vmatpush1.msra.mxu0 0.0
    %993 = vmatprep.subr.mxu0 0.0
    %994 = vmatpush1.msra.mxu0 0.0
    %995 = vmatprep.mubr.f32.mxu0 0.0
    %996 = vmatmul.mubr.f32.gmra.mrb[0].mxu0 %v929
    %v997 = vpop.f32.mrb[0].mxu0
    %v998 = vadd.f32 0.0, %v997
    %v999 = vpop.f32.mrb[0].mxu0
    %1000 = vdwg.mxu0
    %v1001 = vadd.f32 %v225, %v998
    %v1002 = vxor.u32 %v1001, 2147483648
    %v1003 = vmul.f32 %v1002, 1.442695
    %v1004 = vpow.pop %v1003
    %v1005 = vadd.f32 %v1004, 1.0
    %v1006 = vrcp.pop %v1005
    %v1007 = vmul.f32 1.0, %v1006
    %v1008 = vtanh.pop %v1001
    %v1009 = vmul.f32 %v1007, %v919
    %1011 = vrot.lane.b32.xlu0 %v1008, 64
    %v1012 = vpop.permute.xlu0 %1011
    %v1014 = vmul.f32 %v1007, %v1012
    %1016 = vrot.lane.b32.xlu0 %v1014, 32
    %v1017 = vpop.permute.xlu0 %1016
    %v1019 = vadd.f32 %v1009, %v1017
    %v1020 = vtanh.pop %v1019
    %1022 = vrot.lane.b32.xlu0 %v1020, 64
    %v1023 = vpop.permute.xlu0 %1022
    %v1025 = vmul.f32 %v1007, %v1023
    %1028 = vrot.lane.b32.xlu0 %v1025, 32
    %v1029 = vpop.permute.xlu0 %1028
    %v1031 = vsel %vm57, %v328, %v1029
    %v1034 = vsel %vm57, %v428, %v928
    %v1037 = vsel %vm57, %v528, %v828
    %v1040 = vsel %vm57, %v628, %v728
    %v1041 = vsel %vm57, %v728, %v628
    %v1042 = vsel %vm57, %v828, %v528
    %v1043 = vsel %vm57, %v928, %v428
    %v1044 = vsel %vm57, %v1029, %v328
    %v1045 = vld [vmem:[#allocation2 + $0x48] sm:$0xff]
    %v1046 = vld [vmem:[#allocation2 + $0x50] sm:$0xff]
    %v1047 = vld [vmem:[#allocation2 + $0x58] sm:$0xff]
    %v1048 = vld [vmem:[#allocation2 + $0x60] sm:$0xff]
    %v1049 = vld [vmem:[#allocation2 + $0x68] sm:$0xff]
    %v1050 = vld [vmem:[#allocation2 + $0x70] sm:$0xff]
    %v1051 = vld [vmem:[#allocation2 + $0x78] sm:$0xff]
    %v1052 = vld [vmem:[#allocation2 + $0x80] sm:$0xff]
    %v1053 = vld [vmem:[#allocation2 + $0x88] sm:$0xff]
    %v1054 = vld [vmem:[#allocation2 + $0x90] sm:$0xff]
    %v1055 = vld [vmem:[#allocation2 + $0x98] sm:$0xff]
    %v1056 = vld [vmem:[#allocation2 + $0xa0] sm:$0xff]
    %v1057 = vld [vmem:[#allocation2 + $0xa8] sm:$0x1]
    %1059 = vrot.lane.b32.xlu0 %v1044, 32
    %v1060 = vpop.permute.xlu0 %1059
    %v1062 = vsel %vm98, %v1031, %v1060
    %1064 = vrot.lane.b32.xlu0 %v1043, 32
    %v1065 = vpop.permute.xlu0 %1064
    %v1067 = vsel %vm98, %v1034, %v1065
    %1069 = vrot.lane.b32.xlu0 %v1042, 32
    %v1070 = vpop.permute.xlu0 %1069
    %v1072 = vsel %vm98, %v1037, %v1070
    %1074 = vrot.lane.b32.xlu0 %v1041, 32
    %v1075 = vpop.permute.xlu0 %1074
    %v1077 = vsel %vm98, %v1040, %v1075
    %1079 = vrot.lane.b32.xlu0 %v1040, 32
    %v1080 = vpop.permute.xlu0 %1079
    %v1082 = vsel %vm98, %v1041, %v1080
    %1084 = vrot.lane.b32.xlu0 %v1037, 32
    %v1085 = vpop.permute.xlu0 %1084
    %v1087 = vsel %vm98, %v1042, %v1085
    %1089 = vrot.lane.b32.xlu0 %v1034, 32
    %v1090 = vpop.permute.xlu0 %1089
    %v1092 = vsel %vm98, %v1043, %v1090
    %1094 = vrot.lane.b32.xlu0 %v1031, 32
    %v1095 = vpop.permute.xlu0 %1094
    %v1097 = vsel %vm98, %v1044, %v1095
    %v1098 = vlaneseq
    %v1099 = vshrl.u32 %v1098, 7
    %v1100 = vsub.s32 0, %v1099
    %v1101 = vrot.slane %v1057, %v1100
    %vm1102 = vcmask 523264
    %v1104 = vsel %vm1102, %v1062, 0
    %v1107 = vsel %vm1102, %v1067, 0
    %v1110 = vsel %vm1102, %v1072, 0
    %v1113 = vsel %vm1102, %v1077, 0
    %v1116 = vsel %vm1102, %v1082, 0
    %v1119 = vsel %vm1102, %v1087, 0
    %v1122 = vsel %vm1102, %v1092, 0
    %v1125 = vsel %vm1102, %v1097, 0
    %1127 = vmatprep.subr.mxu0 0.0
    %1128 = vmatpush1.msra.mxu0 %v1045
    %1129 = vmatprep.subr.mxu0 0.0
    %1130 = vmatpush1.msra.mxu0 %v1046
    %1131 = vmatprep.subr.mxu0 0.0
    %1132 = vmatpush1.msra.mxu0 %v1047
    %1133 = vmatprep.subr.mxu0 0.0
    %1134 = vmatpush1.msra.mxu0 %v1048
    %1135 = vmatprep.subr.mxu0 0.0
    %1136 = vmatpush1.msra.mxu0 %v1049
    %1137 = vmatprep.subr.mxu0 0.0
    %1138 = vmatpush1.msra.mxu0 %v1050
    %1139 = vmatprep.subr.mxu0 0.0
    %1140 = vmatpush1.msra.mxu0 %v1051
    %1141 = vmatprep.subr.mxu0 0.0
    %1142 = vmatpush1.msra.mxu0 %v1052
    %1143 = vmatprep.subr.mxu0 0.0
    %1144 = vmatpush1.msra.mxu0 0.0
    %1145 = vmatprep.subr.mxu0 0.0
    %1146 = vmatpush1.msra.mxu0 0.0
    %1147 = vmatprep.subr.mxu0 0.0
    %1148 = vmatpush1.msra.mxu0 0.0
    %1149 = vmatprep.subr.mxu0 0.0
    %1150 = vmatpush1.msra.mxu0 0.0
    %1151 = vmatprep.subr.mxu0 0.0
    %1152 = vmatpush1.msra.mxu0 0.0
    %1153 = vmatprep.subr.mxu0 0.0
    %1154 = vmatpush1.msra.mxu0 0.0
    %1155 = vmatprep.subr.mxu0 0.0
    %1156 = vmatpush1.msra.mxu0 0.0
    %1157 = vmatprep.subr.mxu0 0.0
    %1158 = vmatpush1.msra.mxu0 0.0
    %1159 = vmatprep.subr.mxu0 0.0
    %1160 = vmatpush1.msra.mxu0 0.0
    %1161 = vmatprep.subr.mxu0 0.0
    %1162 = vmatpush1.msra.mxu0 0.0
    %1163 = vmatprep.subr.mxu0 0.0
    %1164 = vmatpush1.msra.mxu0 0.0
    %1165 = vmatprep.subr.mxu0 0.0
    %1166 = vmatpush1.msra.mxu0 0.0
    %1167 = vmatprep.subr.mxu0 0.0
    %1168 = vmatpush1.msra.mxu0 0.0
    %1169 = vmatprep.subr.mxu0 0.0
    %1170 = vmatpush1.msra.mxu0 0.0
    %1171 = vmatprep.subr.mxu0 0.0
    %1172 = vmatpush1.msra.mxu0 0.0
    %1173 = vmatprep.subr.mxu0 0.0
    %1174 = vmatpush1.msra.mxu0 0.0
    %1175 = vmatprep.subr.mxu0 0.0
    %1176 = vmatpush1.msra.mxu0 0.0
    %1177 = vmatprep.subr.mxu0 0.0
    %1178 = vmatpush1.msra.mxu0 0.0
    %1179 = vmatprep.subr.mxu0 0.0
    %1180 = vmatpush1.msra.mxu0 0.0
    %1181 = vmatprep.subr.mxu0 0.0
    %1182 = vmatpush1.msra.mxu0 0.0
    %1183 = vmatprep.subr.mxu0 0.0
    %1184 = vmatpush1.msra.mxu0 0.0
    %1185 = vmatprep.subr.mxu0 0.0
    %1186 = vmatpush1.msra.mxu0 0.0
    %1187 = vmatprep.subr.mxu0 0.0
    %1188 = vmatpush1.msra.mxu0 0.0
    %1189 = vmatprep.subr.mxu0 0.0
    %1190 = vmatpush1.msra.mxu0 0.0
    %1191 = vmatprep.mubr.f32.mxu0 0.0
    %1192 = vmatmul.mubr.f32.gmra.mrb[0].mxu0 %v1104
    %v1193 = vpop.f32.mrb[0].mxu0
    %v1194 = vadd.f32 %v1101, %v1193
    %v1195 = vpop.f32.mrb[0].mxu0
    %1196 = vmatprep.mubr.f32.mxu0 0.0
    %1197 = vmatmul.mubr.f32.gmra.mrb[0].mxu0 %v1107
    %v1198 = vpop.f32.mrb[0].mxu0
    %v1199 = vadd.f32 %v1101, %v1198
    %v1200 = vpop.f32.mrb[0].mxu0
    %1201 = vmatprep.mubr.f32.mxu0 0.0
    %1202 = vmatmul.mubr.f32.gmra.mrb[0].mxu0 %v1110
    %v1203 = vpop.f32.mrb[0].mxu0
    %v1204 = vadd.f32 %v1101, %v1203
    %v1205 = vpop.f32.mrb[0].mxu0
    %1206 = vmatprep.mubr.f32.mxu0 0.0
    %1207 = vmatmul.mubr.f32.gmra.mrb[0].mxu0 %v1113
    %v1208 = vpop.f32.mrb[0].mxu0
    %v1209 = vadd.f32 %v1101, %v1208
    %v1210 = vpop.f32.mrb[0].mxu0
    %1211 = vmatprep.mubr.f32.mxu0 0.0
    %1212 = vmatmul.mubr.f32.gmra.mrb[0].mxu0 %v1116
    %v1213 = vpop.f32.mrb[0].mxu0
    %v1214 = vadd.f32 %v1101, %v1213
    %v1215 = vpop.f32.mrb[0].mxu0
    %1216 = vmatprep.mubr.f32.mxu0 0.0
    %1217 = vmatmul.mubr.f32.gmra.mrb[0].mxu0 %v1119
    %v1218 = vpop.f32.mrb[0].mxu0
    %v1219 = vadd.f32 %v1101, %v1218
    %v1220 = vpop.f32.mrb[0].mxu0
    %1221 = vmatprep.mubr.f32.mxu0 0.0
    %1222 = vmatmul.mubr.f32.gmra.mrb[0].mxu0 %v1122
    %v1223 = vpop.f32.mrb[0].mxu0
    %v1224 = vadd.f32 %v1101, %v1223
    %v1225 = vpop.f32.mrb[0].mxu0
    %1226 = vmatprep.mubr.f32.mxu0 0.0
    %1227 = vmatmul.mubr.f32.gmra.mrb[0].mxu0 %v1125
    %v1228 = vpop.f32.mrb[0].mxu0
    %v1229 = vadd.f32 %v1101, %v1228
    %v1230 = vpop.f32.mrb[0].mxu0
    %1231 = vdwg.mxu0
    %1232 = vmatprep.subr.mxu0 0.0
    %1233 = vmatpush1.msra.mxu0 %v1053
    %1234 = vmatprep.subr.mxu0 0.0
    %1235 = vmatpush1.msra.mxu0 %v1054
    %1236 = vmatprep.subr.mxu0 0.0
    %1237 = vmatpush1.msra.mxu0 %v1055
    %1238 = vmatprep.subr.mxu0 0.0
    %1239 = vmatpush1.msra.mxu0 %v1056
    %1240 = vmatprep.subr.mxu0 0.0
    %1241 = vmatpush1.msra.mxu0 0.0
    %1242 = vmatprep.subr.mxu0 0.0
    %1243 = vmatpush1.msra.mxu0 0.0
    %1244 = vmatprep.subr.mxu0 0.0
    %1245 = vmatpush1.msra.mxu0 0.0
    %1246 = vmatprep.subr.mxu0 0.0
    %1247 = vmatpush1.msra.mxu0 0.0
    %1248 = vmatprep.subr.mxu0 0.0
    %1249 = vmatpush1.msra.mxu0 0.0
    %1250 = vmatprep.subr.mxu0 0.0
    %1251 = vmatpush1.msra.mxu0 0.0
    %1252 = vmatprep.subr.mxu0 0.0
    %1253 = vmatpush1.msra.mxu0 0.0
    %1254 = vmatprep.subr.mxu0 0.0
    %1255 = vmatpush1.msra.mxu0 0.0
    %1256 = vmatprep.subr.mxu0 0.0
    %1257 = vmatpush1.msra.mxu0 0.0
    %1258 = vmatprep.subr.mxu0 0.0
    %1259 = vmatpush1.msra.mxu0 0.0
    %1260 = vmatprep.subr.mxu0 0.0
    %1261 = vmatpush1.msra.mxu0 0.0
    %1262 = vmatprep.subr.mxu0 0.0
    %1263 = vmatpush1.msra.mxu0 0.0
    %1264 = vmatprep.subr.mxu0 0.0
    %1265 = vmatpush1.msra.mxu0 0.0
    %1266 = vmatprep.subr.mxu0 0.0
    %1267 = vmatpush1.msra.mxu0 0.0
    %1268 = vmatprep.subr.mxu0 0.0
    %1269 = vmatpush1.msra.mxu0 0.0
    %1270 = vmatprep.subr.mxu0 0.0
    %1271 = vmatpush1.msra.mxu0 0.0
    %1272 = vmatprep.subr.mxu0 0.0
    %1273 = vmatpush1.msra.mxu0 0.0
    %1274 = vmatprep.subr.mxu0 0.0
    %1275 = vmatpush1.msra.mxu0 0.0
    %1276 = vmatprep.subr.mxu0 0.0
    %1277 = vmatpush1.msra.mxu0 0.0
    %1278 = vmatprep.subr.mxu0 0.0
    %1279 = vmatpush1.msra.mxu0 0.0
    %1280 = vmatprep.subr.mxu0 0.0
    %1281 = vmatpush1.msra.mxu0 0.0
    %1282 = vmatprep.subr.mxu0 0.0
    %1283 = vmatpush1.msra.mxu0 0.0
    %1284 = vmatprep.subr.mxu0 0.0
    %1285 = vmatpush1.msra.mxu0 0.0
    %1286 = vmatprep.subr.mxu0 0.0
    %1287 = vmatpush1.msra.mxu0 0.0
    %1288 = vmatprep.subr.mxu0 0.0
    %1289 = vmatpush1.msra.mxu0 0.0
    %1290 = vmatprep.subr.mxu0 0.0
    %1291 = vmatpush1.msra.mxu0 0.0
    %1292 = vmatprep.subr.mxu0 0.0
    %1293 = vmatpush1.msra.mxu0 0.0
    %1294 = vmatprep.subr.mxu0 0.0
    %1295 = vmatpush1.msra.mxu0 0.0
    %1296 = vmatprep.mubr.f32.mxu0 0.0
    %1297 = vmatmul.mubr.f32.gmra.mrb[0].mxu0 %v229
    %v1298 = vpop.f32.mrb[0].mxu0
    %v1299 = vadd.f32 0.0, %v1298
    %v1300 = vpop.f32.mrb[0].mxu0
    %1301 = vdwg.mxu0
    %v1302 = vadd.f32 %v1194, %v1299
    %v1303 = vxor.u32 %v1302, 2147483648
    %v1304 = vmul.f32 %v1303, 1.442695
    %v1305 = vpow.pop %v1304
    %v1306 = vadd.f32 %v1305, 1.0
    %v1307 = vrcp.pop %v1306
    %v1308 = vmul.f32 1.0, %v1307
    %v1309 = vtanh.pop %v1302
    %v1310 = vmul.f32 %v1308, 0.0
    %1312 = vrot.lane.b32.xlu0 %v1309, 64
    %v1313 = vpop.permute.xlu0 %1312
    %v1315 = vmul.f32 %v1308, %v1313
    %1317 = vrot.lane.b32.xlu0 %v1315, 32
    %v1318 = vpop.permute.xlu0 %1317
    %v1320 = vadd.f32 %v1310, %v1318
    %v1321 = vtanh.pop %v1320
    %1323 = vrot.lane.b32.xlu0 %v1321, 64
    %v1324 = vpop.permute.xlu0 %1323
    %v1326 = vmul.f32 %v1308, %v1324
    %vm1327 = vcmp.eq.s32.totalorder %v28, 0
    %v1328 = vsel %vm1327, 1, 0
    %1329 = vset.pattern.permute.xlu0 0
    %1330 = vperm.xlu0 %1329, %v1328
    %v1331 = vpop.permute.xlu0 %1330
    %vm1332 = vcmp.eq.s32.totalorder %v1331, 1
    %v1333 = vsel %vm1332, %v1326, 0.0
    %vm1334 = vcmp.eq.s32.totalorder %v28, 7
    %v1335 = vsel %vm1334, 1, 0
    %1336 = vset.pattern.permute.xlu0 0
    %1337 = vperm.xlu0 %1336, %v1335
    %v1338 = vpop.permute.xlu0 %1337
    %vm1339 = vcmp.eq.s32.totalorder %v1338, 1
    %v1340 = vsel %vm1339, %v1326, 0.0
    %1342 = vrot.lane.b32.xlu0 %v1326, 32
    %v1343 = vpop.permute.xlu0 %1342
    %v1344 = vsel %vm98, %v1343, 0
    %1346 = vmatprep.subr.mxu0 0.0
    %1347 = vmatpush1.msra.mxu0 %v1053
    %1348 = vmatprep.subr.mxu0 0.0
    %1349 = vmatpush1.msra.mxu0 %v1054
    %1350 = vmatprep.subr.mxu0 0.0
    %1351 = vmatpush1.msra.mxu0 %v1055
    %1352 = vmatprep.subr.mxu0 0.0
    %1353 = vmatpush1.msra.mxu0 %v1056
    %1354 = vmatprep.subr.mxu0 0.0
    %1355 = vmatpush1.msra.mxu0 0.0
    %1356 = vmatprep.subr.mxu0 0.0
    %1357 = vmatpush1.msra.mxu0 0.0
    %1358 = vmatprep.subr.mxu0 0.0
    %1359 = vmatpush1.msra.mxu0 0.0
    %1360 = vmatprep.subr.mxu0 0.0
    %1361 = vmatpush1.msra.mxu0 0.0
    %1362 = vmatprep.subr.mxu0 0.0
    %1363 = vmatpush1.msra.mxu0 0.0
    %1364 = vmatprep.subr.mxu0 0.0
    %1365 = vmatpush1.msra.mxu0 0.0
    %1366 = vmatprep.subr.mxu0 0.0
    %1367 = vmatpush1.msra.mxu0 0.0
    %1368 = vmatprep.subr.mxu0 0.0
    %1369 = vmatpush1.msra.mxu0 0.0
    %1370 = vmatprep.subr.mxu0 0.0
    %1371 = vmatpush1.msra.mxu0 0.0
    %1372 = vmatprep.subr.mxu0 0.0
    %1373 = vmatpush1.msra.mxu0 0.0
    %1374 = vmatprep.subr.mxu0 0.0
    %1375 = vmatpush1.msra.mxu0 0.0
    %1376 = vmatprep.subr.mxu0 0.0
    %1377 = vmatpush1.msra.mxu0 0.0
    %1378 = vmatprep.subr.mxu0 0.0
    %1379 = vmatpush1.msra.mxu0 0.0
    %1380 = vmatprep.subr.mxu0 0.0
    %1381 = vmatpush1.msra.mxu0 0.0
    %1382 = vmatprep.subr.mxu0 0.0
    %1383 = vmatpush1.msra.mxu0 0.0
    %1384 = vmatprep.subr.mxu0 0.0
    %1385 = vmatpush1.msra.mxu0 0.0
    %1386 = vmatprep.subr.mxu0 0.0
    %1387 = vmatpush1.msra.mxu0 0.0
    %1388 = vmatprep.subr.mxu0 0.0
    %1389 = vmatpush1.msra.mxu0 0.0
    %1390 = vmatprep.subr.mxu0 0.0
    %1391 = vmatpush1.msra.mxu0 0.0
    %1392 = vmatprep.subr.mxu0 0.0
    %1393 = vmatpush1.msra.mxu0 0.0
    %1394 = vmatprep.subr.mxu0 0.0
    %1395 = vmatpush1.msra.mxu0 0.0
    %1396 = vmatprep.subr.mxu0 0.0
    %1397 = vmatpush1.msra.mxu0 0.0
    %1398 = vmatprep.subr.mxu0 0.0
    %1399 = vmatpush1.msra.mxu0 0.0
    %1400 = vmatprep.subr.mxu0 0.0
    %1401 = vmatpush1.msra.mxu0 0.0
    %1402 = vmatprep.subr.mxu0 0.0
    %1403 = vmatpush1.msra.mxu0 0.0
    %1404 = vmatprep.subr.mxu0 0.0
    %1405 = vmatpush1.msra.mxu0 0.0
    %1406 = vmatprep.subr.mxu0 0.0
    %1407 = vmatpush1.msra.mxu0 0.0
    %1408 = vmatprep.subr.mxu0 0.0
    %1409 = vmatpush1.msra.mxu0 0.0
    %1410 = vmatprep.mubr.f32.mxu0 0.0
    %1411 = vmatmul.mubr.f32.gmra.mrb[0].mxu0 %v1344
    %v1412 = vpop.f32.mrb[0].mxu0
    %v1413 = vadd.f32 0.0, %v1412
    %v1414 = vpop.f32.mrb[0].mxu0
    %1415 = vdwg.mxu0
    %v1416 = vadd.f32 %v1199, %v1413
    %v1417 = vxor.u32 %v1416, 2147483648
    %v1418 = vmul.f32 %v1417, 1.442695
    %v1419 = vpow.pop %v1418
    %v1420 = vadd.f32 %v1419, 1.0
    %v1421 = vrcp.pop %v1420
    %v1422 = vmul.f32 1.0, %v1421
    %v1423 = vtanh.pop %v1416
    %v1424 = vmul.f32 %v1422, %v1320
    %1426 = vrot.lane.b32.xlu0 %v1423, 64
    %v1427 = vpop.permute.xlu0 %1426
    %v1429 = vmul.f32 %v1422, %v1427
    %1431 = vrot.lane.b32.xlu0 %v1429, 32
    %v1432 = vpop.permute.xlu0 %1431
    %v1434 = vadd.f32 %v1424, %v1432
    %v1435 = vtanh.pop %v1434
    %1437 = vrot.lane.b32.xlu0 %v1435, 64
    %v1438 = vpop.permute.xlu0 %1437
    %v1440 = vmul.f32 %v1422, %v1438
    %vm1441 = vcmp.eq.s32.totalorder %v28, 1
    %v1442 = vsel %vm1441, 1, 0
    %1443 = vset.pattern.permute.xlu0 0
    %1444 = vperm.xlu0 %1443, %v1442
    %v1445 = vpop.permute.xlu0 %1444
    %vm1446 = vcmp.eq.s32.totalorder %v1445, 1
    %v1447 = vsel %vm1446, %v1440, %v1333
    %vm1448 = vcmp.eq.s32.totalorder %v28, 6
    %v1449 = vsel %vm1448, 1, 0
    %1450 = vset.pattern.permute.xlu0 0
    %1451 = vperm.xlu0 %1450, %v1449
    %v1452 = vpop.permute.xlu0 %1451
    %vm1453 = vcmp.eq.s32.totalorder %v1452, 1
    %v1454 = vsel %vm1453, %v1440, %v1340
    %1456 = vrot.lane.b32.xlu0 %v1440, 32
    %v1457 = vpop.permute.xlu0 %1456
    %v1458 = vsel %vm98, %v1457, 0
    %1460 = vmatprep.subr.mxu0 0.0
    %1461 = vmatpush1.msra.mxu0 %v1053
    %1462 = vmatprep.subr.mxu0 0.0
    %1463 = vmatpush1.msra.mxu0 %v1054
    %1464 = vmatprep.subr.mxu0 0.0
    %1465 = vmatpush1.msra.mxu0 %v1055
    %1466 = vmatprep.subr.mxu0 0.0
    %1467 = vmatpush1.msra.mxu0 %v1056
    %1468 = vmatprep.subr.mxu0 0.0
    %1469 = vmatpush1.msra.mxu0 0.0
    %1470 = vmatprep.subr.mxu0 0.0
    %1471 = vmatpush1.msra.mxu0 0.0
    %1472 = vmatprep.subr.mxu0 0.0
    %1473 = vmatpush1.msra.mxu0 0.0
    %1474 = vmatprep.subr.mxu0 0.0
    %1475 = vmatpush1.msra.mxu0 0.0
    %1476 = vmatprep.subr.mxu0 0.0
    %1477 = vmatpush1.msra.mxu0 0.0
    %1478 = vmatprep.subr.mxu0 0.0
    %1479 = vmatpush1.msra.mxu0 0.0
    %1480 = vmatprep.subr.mxu0 0.0
    %1481 = vmatpush1.msra.mxu0 0.0
    %1482 = vmatprep.subr.mxu0 0.0
    %1483 = vmatpush1.msra.mxu0 0.0
    %1484 = vmatprep.subr.mxu0 0.0
    %1485 = vmatpush1.msra.mxu0 0.0
    %1486 = vmatprep.subr.mxu0 0.0
    %1487 = vmatpush1.msra.mxu0 0.0
    %1488 = vmatprep.subr.mxu0 0.0
    %1489 = vmatpush1.msra.mxu0 0.0
    %1490 = vmatprep.subr.mxu0 0.0
    %1491 = vmatpush1.msra.mxu0 0.0
    %1492 = vmatprep.subr.mxu0 0.0
    %1493 = vmatpush1.msra.mxu0 0.0
    %1494 = vmatprep.subr.mxu0 0.0
    %1495 = vmatpush1.msra.mxu0 0.0
    %1496 = vmatprep.subr.mxu0 0.0
    %1497 = vmatpush1.msra.mxu0 0.0
    %1498 = vmatprep.subr.mxu0 0.0
    %1499 = vmatpush1.msra.mxu0 0.0
    %1500 = vmatprep.subr.mxu0 0.0
    %1501 = vmatpush1.msra.mxu0 0.0
    %1502 = vmatprep.subr.mxu0 0.0
    %1503 = vmatpush1.msra.mxu0 0.0
    %1504 = vmatprep.subr.mxu0 0.0
    %1505 = vmatpush1.msra.mxu0 0.0
    %1506 = vmatprep.subr.mxu0 0.0
    %1507 = vmatpush1.msra.mxu0 0.0
    %1508 = vmatprep.subr.mxu0 0.0
    %1509 = vmatpush1.msra.mxu0 0.0
    %1510 = vmatprep.subr.mxu0 0.0
    %1511 = vmatpush1.msra.mxu0 0.0
    %1512 = vmatprep.subr.mxu0 0.0
    %1513 = vmatpush1.msra.mxu0 0.0
    %1514 = vmatprep.subr.mxu0 0.0
    %1515 = vmatpush1.msra.mxu0 0.0
    %1516 = vmatprep.subr.mxu0 0.0
    %1517 = vmatpush1.msra.mxu0 0.0
    %1518 = vmatprep.subr.mxu0 0.0
    %1519 = vmatpush1.msra.mxu0 0.0
    %1520 = vmatprep.subr.mxu0 0.0
    %1521 = vmatpush1.msra.mxu0 0.0
    %1522 = vmatprep.subr.mxu0 0.0
    %1523 = vmatpush1.msra.mxu0 0.0
    %1524 = vmatprep.mubr.f32.mxu0 0.0
    %1525 = vmatmul.mubr.f32.gmra.mrb[0].mxu0 %v1458
    %v1526 = vpop.f32.mrb[0].mxu0
    %v1527 = vadd.f32 0.0, %v1526
    %v1528 = vpop.f32.mrb[0].mxu0
    %1529 = vdwg.mxu0
    %v1530 = vadd.f32 %v1204, %v1527
    %v1531 = vxor.u32 %v1530, 2147483648
    %v1532 = vmul.f32 %v1531, 1.442695
    %v1533 = vpow.pop %v1532
    %v1534 = vadd.f32 %v1533, 1.0
    %v1535 = vrcp.pop %v1534
    %v1536 = vmul.f32 1.0, %v1535
    %v1537 = vtanh.pop %v1530
    %v1538 = vmul.f32 %v1536, %v1434
    %1540 = vrot.lane.b32.xlu0 %v1537, 64
    %v1541 = vpop.permute.xlu0 %1540
    %v1543 = vmul.f32 %v1536, %v1541
    %1545 = vrot.lane.b32.xlu0 %v1543, 32
    %v1546 = vpop.permute.xlu0 %1545
    %v1548 = vadd.f32 %v1538, %v1546
    %v1549 = vtanh.pop %v1548
    %1551 = vrot.lane.b32.xlu0 %v1549, 64
    %v1552 = vpop.permute.xlu0 %1551
    %v1554 = vmul.f32 %v1536, %v1552
    %vm1555 = vcmp.eq.s32.totalorder %v28, 2
    %v1556 = vsel %vm1555, 1, 0
    %1557 = vset.pattern.permute.xlu0 0
    %1558 = vperm.xlu0 %1557, %v1556
    %v1559 = vpop.permute.xlu0 %1558
    %vm1560 = vcmp.eq.s32.totalorder %v1559, 1
    %v1561 = vsel %vm1560, %v1554, %v1447
    %vm1562 = vcmp.eq.s32.totalorder %v28, 5
    %v1563 = vsel %vm1562, 1, 0
    %1564 = vset.pattern.permute.xlu0 0
    %1565 = vperm.xlu0 %1564, %v1563
    %v1566 = vpop.permute.xlu0 %1565
    %vm1567 = vcmp.eq.s32.totalorder %v1566, 1
    %v1568 = vsel %vm1567, %v1554, %v1454
    %1570 = vrot.lane.b32.xlu0 %v1554, 32
    %v1571 = vpop.permute.xlu0 %1570
    %v1572 = vsel %vm98, %v1571, 0
    %1574 = vmatprep.subr.mxu0 0.0
    %1575 = vmatpush1.msra.mxu0 %v1053
    %1576 = vmatprep.subr.mxu0 0.0
    %1577 = vmatpush1.msra.mxu0 %v1054
    %1578 = vmatprep.subr.mxu0 0.0
    %1579 = vmatpush1.msra.mxu0 %v1055
    %1580 = vmatprep.subr.mxu0 0.0
    %1581 = vmatpush1.msra.mxu0 %v1056
    %1582 = vmatprep.subr.mxu0 0.0
    %1583 = vmatpush1.msra.mxu0 0.0
    %1584 = vmatprep.subr.mxu0 0.0
    %1585 = vmatpush1.msra.mxu0 0.0
    %1586 = vmatprep.subr.mxu0 0.0
    %1587 = vmatpush1.msra.mxu0 0.0
    %1588 = vmatprep.subr.mxu0 0.0
    %1589 = vmatpush1.msra.mxu0 0.0
    %1590 = vmatprep.subr.mxu0 0.0
    %1591 = vmatpush1.msra.mxu0 0.0
    %1592 = vmatprep.subr.mxu0 0.0
    %1593 = vmatpush1.msra.mxu0 0.0
    %1594 = vmatprep.subr.mxu0 0.0
    %1595 = vmatpush1.msra.mxu0 0.0
    %1596 = vmatprep.subr.mxu0 0.0
    %1597 = vmatpush1.msra.mxu0 0.0
    %1598 = vmatprep.subr.mxu0 0.0
    %1599 = vmatpush1.msra.mxu0 0.0
    %1600 = vmatprep.subr.mxu0 0.0
    %1601 = vmatpush1.msra.mxu0 0.0
    %1602 = vmatprep.subr.mxu0 0.0
    %1603 = vmatpush1.msra.mxu0 0.0
    %1604 = vmatprep.subr.mxu0 0.0
    %1605 = vmatpush1.msra.mxu0 0.0
    %1606 = vmatprep.subr.mxu0 0.0
    %1607 = vmatpush1.msra.mxu0 0.0
    %1608 = vmatprep.subr.mxu0 0.0
    %1609 = vmatpush1.msra.mxu0 0.0
    %1610 = vmatprep.subr.mxu0 0.0
    %1611 = vmatpush1.msra.mxu0 0.0
    %1612 = vmatprep.subr.mxu0 0.0
    %1613 = vmatpush1.msra.mxu0 0.0
    %1614 = vmatprep.subr.mxu0 0.0
    %1615 = vmatpush1.msra.mxu0 0.0
    %1616 = vmatprep.subr.mxu0 0.0
    %1617 = vmatpush1.msra.mxu0 0.0
    %1618 = vmatprep.subr.mxu0 0.0
    %1619 = vmatpush1.msra.mxu0 0.0
    %1620 = vmatprep.subr.mxu0 0.0
    %1621 = vmatpush1.msra.mxu0 0.0
    %1622 = vmatprep.subr.mxu0 0.0
    %1623 = vmatpush1.msra.mxu0 0.0
    %1624 = vmatprep.subr.mxu0 0.0
    %1625 = vmatpush1.msra.mxu0 0.0
    %1626 = vmatprep.subr.mxu0 0.0
    %1627 = vmatpush1.msra.mxu0 0.0
    %1628 = vmatprep.subr.mxu0 0.0
    %1629 = vmatpush1.msra.mxu0 0.0
    %1630 = vmatprep.subr.mxu0 0.0
    %1631 = vmatpush1.msra.mxu0 0.0
    %1632 = vmatprep.subr.mxu0 0.0
    %1633 = vmatpush1.msra.mxu0 0.0
    %1634 = vmatprep.subr.mxu0 0.0
    %1635 = vmatpush1.msra.mxu0 0.0
    %1636 = vmatprep.subr.mxu0 0.0
    %1637 = vmatpush1.msra.mxu0 0.0
    %1638 = vmatprep.mubr.f32.mxu0 0.0
    %1639 = vmatmul.mubr.f32.gmra.mrb[0].mxu0 %v1572
    %v1640 = vpop.f32.mrb[0].mxu0
    %v1641 = vadd.f32 0.0, %v1640
    %v1642 = vpop.f32.mrb[0].mxu0
    %1643 = vdwg.mxu0
    %v1644 = vadd.f32 %v1209, %v1641
    %v1645 = vxor.u32 %v1644, 2147483648
    %v1646 = vmul.f32 %v1645, 1.442695
    %v1647 = vpow.pop %v1646
    %v1648 = vadd.f32 %v1647, 1.0
    %v1649 = vrcp.pop %v1648
    %v1650 = vmul.f32 1.0, %v1649
    %v1651 = vtanh.pop %v1644
    %v1652 = vmul.f32 %v1650, %v1548
    %1654 = vrot.lane.b32.xlu0 %v1651, 64
    %v1655 = vpop.permute.xlu0 %1654
    %v1657 = vmul.f32 %v1650, %v1655
    %1659 = vrot.lane.b32.xlu0 %v1657, 32
    %v1660 = vpop.permute.xlu0 %1659
    %v1662 = vadd.f32 %v1652, %v1660
    %v1663 = vtanh.pop %v1662
    %1665 = vrot.lane.b32.xlu0 %v1663, 64
    %v1666 = vpop.permute.xlu0 %1665
    %v1668 = vmul.f32 %v1650, %v1666
    %vm1669 = vcmp.eq.s32.totalorder %v28, 3
    %v1670 = vsel %vm1669, 1, 0
    %1671 = vset.pattern.permute.xlu0 0
    %1672 = vperm.xlu0 %1671, %v1670
    %v1673 = vpop.permute.xlu0 %1672
    %vm1674 = vcmp.eq.s32.totalorder %v1673, 1
    %v1675 = vsel %vm1674, %v1668, %v1561
    %vm1676 = vcmp.eq.s32.totalorder %v28, 4
    %v1677 = vsel %vm1676, 1, 0
    %1678 = vset.pattern.permute.xlu0 0
    %1679 = vperm.xlu0 %1678, %v1677
    %v1680 = vpop.permute.xlu0 %1679
    %vm1681 = vcmp.eq.s32.totalorder %v1680, 1
    %v1682 = vsel %vm1681, %v1668, %v1568
    %1684 = vrot.lane.b32.xlu0 %v1668, 32
    %v1685 = vpop.permute.xlu0 %1684
    %v1686 = vsel %vm98, %v1685, 0
    %1688 = vmatprep.subr.mxu0 0.0
    %1689 = vmatpush1.msra.mxu0 %v1053
    %1690 = vmatprep.subr.mxu0 0.0
    %1691 = vmatpush1.msra.mxu0 %v1054
    %1692 = vmatprep.subr.mxu0 0.0
    %1693 = vmatpush1.msra.mxu0 %v1055
    %1694 = vmatprep.subr.mxu0 0.0
    %1695 = vmatpush1.msra.mxu0 %v1056
    %1696 = vmatprep.subr.mxu0 0.0
    %1697 = vmatpush1.msra.mxu0 0.0
    %1698 = vmatprep.subr.mxu0 0.0
    %1699 = vmatpush1.msra.mxu0 0.0
    %1700 = vmatprep.subr.mxu0 0.0
    %1701 = vmatpush1.msra.mxu0 0.0
    %1702 = vmatprep.subr.mxu0 0.0
    %1703 = vmatpush1.msra.mxu0 0.0
    %1704 = vmatprep.subr.mxu0 0.0
    %1705 = vmatpush1.msra.mxu0 0.0
    %1706 = vmatprep.subr.mxu0 0.0
    %1707 = vmatpush1.msra.mxu0 0.0
    %1708 = vmatprep.subr.mxu0 0.0
    %1709 = vmatpush1.msra.mxu0 0.0
    %1710 = vmatprep.subr.mxu0 0.0
    %1711 = vmatpush1.msra.mxu0 0.0
    %1712 = vmatprep.subr.mxu0 0.0
    %1713 = vmatpush1.msra.mxu0 0.0
    %1714 = vmatprep.subr.mxu0 0.0
    %1715 = vmatpush1.msra.mxu0 0.0
    %1716 = vmatprep.subr.mxu0 0.0
    %1717 = vmatpush1.msra.mxu0 0.0
    %1718 = vmatprep.subr.mxu0 0.0
    %1719 = vmatpush1.msra.mxu0 0.0
    %1720 = vmatprep.subr.mxu0 0.0
    %1721 = vmatpush1.msra.mxu0 0.0
    %1722 = vmatprep.subr.mxu0 0.0
    %1723 = vmatpush1.msra.mxu0 0.0
    %1724 = vmatprep.subr.mxu0 0.0
    %1725 = vmatpush1.msra.mxu0 0.0
    %1726 = vmatprep.subr.mxu0 0.0
    %1727 = vmatpush1.msra.mxu0 0.0
    %1728 = vmatprep.subr.mxu0 0.0
    %1729 = vmatpush1.msra.mxu0 0.0
    %1730 = vmatprep.subr.mxu0 0.0
    %1731 = vmatpush1.msra.mxu0 0.0
    %1732 = vmatprep.subr.mxu0 0.0
    %1733 = vmatpush1.msra.mxu0 0.0
    %1734 = vmatprep.subr.mxu0 0.0
    %1735 = vmatpush1.msra.mxu0 0.0
    %1736 = vmatprep.subr.mxu0 0.0
    %1737 = vmatpush1.msra.mxu0 0.0
    %1738 = vmatprep.subr.mxu0 0.0
    %1739 = vmatpush1.msra.mxu0 0.0
    %1740 = vmatprep.subr.mxu0 0.0
    %1741 = vmatpush1.msra.mxu0 0.0
    %1742 = vmatprep.subr.mxu0 0.0
    %1743 = vmatpush1.msra.mxu0 0.0
    %1744 = vmatprep.subr.mxu0 0.0
    %1745 = vmatpush1.msra.mxu0 0.0
    %1746 = vmatprep.subr.mxu0 0.0
    %1747 = vmatpush1.msra.mxu0 0.0
    %1748 = vmatprep.subr.mxu0 0.0
    %1749 = vmatpush1.msra.mxu0 0.0
    %1750 = vmatprep.subr.mxu0 0.0
    %1751 = vmatpush1.msra.mxu0 0.0
    %1752 = vmatprep.mubr.f32.mxu0 0.0
    %1753 = vmatmul.mubr.f32.gmra.mrb[0].mxu0 %v1686
    %v1754 = vpop.f32.mrb[0].mxu0
    %v1755 = vadd.f32 0.0, %v1754
    %v1756 = vpop.f32.mrb[0].mxu0
    %1757 = vdwg.mxu0
    %v1758 = vadd.f32 %v1214, %v1755
    %v1759 = vxor.u32 %v1758, 2147483648
    %v1760 = vmul.f32 %v1759, 1.442695
    %v1761 = vpow.pop %v1760
    %v1762 = vadd.f32 %v1761, 1.0
    %v1763 = vrcp.pop %v1762
    %v1764 = vmul.f32 1.0, %v1763
    %v1765 = vtanh.pop %v1758
    %v1766 = vmul.f32 %v1764, %v1662
    %1768 = vrot.lane.b32.xlu0 %v1765, 64
    %v1769 = vpop.permute.xlu0 %1768
    %v1771 = vmul.f32 %v1764, %v1769
    %1773 = vrot.lane.b32.xlu0 %v1771, 32
    %v1774 = vpop.permute.xlu0 %1773
    %v1776 = vadd.f32 %v1766, %v1774
    %v1777 = vtanh.pop %v1776
    %1779 = vrot.lane.b32.xlu0 %v1777, 64
    %v1780 = vpop.permute.xlu0 %1779
    %v1782 = vmul.f32 %v1764, %v1780
    %v1783 = vsel %vm1681, %v1782, %v1675
    %v1784 = vsel %vm1674, %v1782, %v1682
    %1786 = vrot.lane.b32.xlu0 %v1782, 32
    %v1787 = vpop.permute.xlu0 %1786
    %v1788 = vsel %vm98, %v1787, 0
    %1790 = vmatprep.subr.mxu0 0.0
    %1791 = vmatpush1.msra.mxu0 %v1053
    %1792 = vmatprep.subr.mxu0 0.0
    %1793 = vmatpush1.msra.mxu0 %v1054
    %1794 = vmatprep.subr.mxu0 0.0
    %1795 = vmatpush1.msra.mxu0 %v1055
    %1796 = vmatprep.subr.mxu0 0.0
    %1797 = vmatpush1.msra.mxu0 %v1056
    %1798 = vmatprep.subr.mxu0 0.0
    %1799 = vmatpush1.msra.mxu0 0.0
    %1800 = vmatprep.subr.mxu0 0.0
    %1801 = vmatpush1.msra.mxu0 0.0
    %1802 = vmatprep.subr.mxu0 0.0
    %1803 = vmatpush1.msra.mxu0 0.0
    %1804 = vmatprep.subr.mxu0 0.0
    %1805 = vmatpush1.msra.mxu0 0.0
    %1806 = vmatprep.subr.mxu0 0.0
    %1807 = vmatpush1.msra.mxu0 0.0
    %1808 = vmatprep.subr.mxu0 0.0
    %1809 = vmatpush1.msra.mxu0 0.0
    %1810 = vmatprep.subr.mxu0 0.0
    %1811 = vmatpush1.msra.mxu0 0.0
    %1812 = vmatprep.subr.mxu0 0.0
    %1813 = vmatpush1.msra.mxu0 0.0
    %1814 = vmatprep.subr.mxu0 0.0
    %1815 = vmatpush1.msra.mxu0 0.0
    %1816 = vmatprep.subr.mxu0 0.0
    %1817 = vmatpush1.msra.mxu0 0.0
    %1818 = vmatprep.subr.mxu0 0.0
    %1819 = vmatpush1.msra.mxu0 0.0
    %1820 = vmatprep.subr.mxu0 0.0
    %1821 = vmatpush1.msra.mxu0 0.0
    %1822 = vmatprep.subr.mxu0 0.0
    %1823 = vmatpush1.msra.mxu0 0.0
    %1824 = vmatprep.subr.mxu0 0.0
    %1825 = vmatpush1.msra.mxu0 0.0
    %1826 = vmatprep.subr.mxu0 0.0
    %1827 = vmatpush1.msra.mxu0 0.0
    %1828 = vmatprep.subr.mxu0 0.0
    %1829 = vmatpush1.msra.mxu0 0.0
    %1830 = vmatprep.subr.mxu0 0.0
    %1831 = vmatpush1.msra.mxu0 0.0
    %1832 = vmatprep.subr.mxu0 0.0
    %1833 = vmatpush1.msra.mxu0 0.0
    %1834 = vmatprep.subr.mxu0 0.0
    %1835 = vmatpush1.msra.mxu0 0.0
    %1836 = vmatprep.subr.mxu0 0.0
    %1837 = vmatpush1.msra.mxu0 0.0
    %1838 = vmatprep.subr.mxu0 0.0
    %1839 = vmatpush1.msra.mxu0 0.0
    %1840 = vmatprep.subr.mxu0 0.0
    %1841 = vmatpush1.msra.mxu0 0.0
    %1842 = vmatprep.subr.mxu0 0.0
    %1843 = vmatpush1.msra.mxu0 0.0
    %1844 = vmatprep.subr.mxu0 0.0
    %1845 = vmatpush1.msra.mxu0 0.0
    %1846 = vmatprep.subr.mxu0 0.0
    %1847 = vmatpush1.msra.mxu0 0.0
    %1848 = vmatprep.subr.mxu0 0.0
    %1849 = vmatpush1.msra.mxu0 0.0
    %1850 = vmatprep.subr.mxu0 0.0
    %1851 = vmatpush1.msra.mxu0 0.0
    %1852 = vmatprep.subr.mxu0 0.0
    %1853 = vmatpush1.msra.mxu0 0.0
    %1854 = vmatprep.mubr.f32.mxu0 0.0
    %1855 = vmatmul.mubr.f32.gmra.mrb[0].mxu0 %v1788
    %v1856 = vpop.f32.mrb[0].mxu0
    %v1857 = vadd.f32 0.0, %v1856
    %v1858 = vpop.f32.mrb[0].mxu0
    %1859 = vdwg.mxu0
    %v1860 = vadd.f32 %v1219, %v1857
    %v1861 = vxor.u32 %v1860, 2147483648
    %v1862 = vmul.f32 %v1861, 1.442695
    %v1863 = vpow.pop %v1862
    %v1864 = vadd.f32 %v1863, 1.0
    %v1865 = vrcp.pop %v1864
    %v1866 = vmul.f32 1.0, %v1865
    %v1867 = vtanh.pop %v1860
    %v1868 = vmul.f32 %v1866, %v1776
    %1870 = vrot.lane.b32.xlu0 %v1867, 64
    %v1871 = vpop.permute.xlu0 %1870
    %v1873 = vmul.f32 %v1866, %v1871
    %1875 = vrot.lane.b32.xlu0 %v1873, 32
    %v1876 = vpop.permute.xlu0 %1875
    %v1878 = vadd.f32 %v1868, %v1876
    %v1879 = vtanh.pop %v1878
    %1881 = vrot.lane.b32.xlu0 %v1879, 64
    %v1882 = vpop.permute.xlu0 %1881
    %v1884 = vmul.f32 %v1866, %v1882
    %v1885 = vsel %vm1567, %v1884, %v1783
    %v1886 = vsel %vm1560, %v1884, %v1784
    %1888 = vrot.lane.b32.xlu0 %v1884, 32
    %v1889 = vpop.permute.xlu0 %1888
    %v1890 = vsel %vm98, %v1889, 0
    %1892 = vmatprep.subr.mxu0 0.0
    %1893 = vmatpush1.msra.mxu0 %v1053
    %1894 = vmatprep.subr.mxu0 0.0
    %1895 = vmatpush1.msra.mxu0 %v1054
    %1896 = vmatprep.subr.mxu0 0.0
    %1897 = vmatpush1.msra.mxu0 %v1055
    %1898 = vmatprep.subr.mxu0 0.0
    %1899 = vmatpush1.msra.mxu0 %v1056
    %1900 = vmatprep.subr.mxu0 0.0
    %1901 = vmatpush1.msra.mxu0 0.0
    %1902 = vmatprep.subr.mxu0 0.0
    %1903 = vmatpush1.msra.mxu0 0.0
    %1904 = vmatprep.subr.mxu0 0.0
    %1905 = vmatpush1.msra.mxu0 0.0
    %1906 = vmatprep.subr.mxu0 0.0
    %1907 = vmatpush1.msra.mxu0 0.0
    %1908 = vmatprep.subr.mxu0 0.0
    %1909 = vmatpush1.msra.mxu0 0.0
    %1910 = vmatprep.subr.mxu0 0.0
    %1911 = vmatpush1.msra.mxu0 0.0
    %1912 = vmatprep.subr.mxu0 0.0
    %1913 = vmatpush1.msra.mxu0 0.0
    %1914 = vmatprep.subr.mxu0 0.0
    %1915 = vmatpush1.msra.mxu0 0.0
    %1916 = vmatprep.subr.mxu0 0.0
    %1917 = vmatpush1.msra.mxu0 0.0
    %1918 = vmatprep.subr.mxu0 0.0
    %1919 = vmatpush1.msra.mxu0 0.0
    %1920 = vmatprep.subr.mxu0 0.0
    %1921 = vmatpush1.msra.mxu0 0.0
    %1922 = vmatprep.subr.mxu0 0.0
    %1923 = vmatpush1.msra.mxu0 0.0
    %1924 = vmatprep.subr.mxu0 0.0
    %1925 = vmatpush1.msra.mxu0 0.0
    %1926 = vmatprep.subr.mxu0 0.0
    %1927 = vmatpush1.msra.mxu0 0.0
    %1928 = vmatprep.subr.mxu0 0.0
    %1929 = vmatpush1.msra.mxu0 0.0
    %1930 = vmatprep.subr.mxu0 0.0
    %1931 = vmatpush1.msra.mxu0 0.0
    %1932 = vmatprep.subr.mxu0 0.0
    %1933 = vmatpush1.msra.mxu0 0.0
    %1934 = vmatprep.subr.mxu0 0.0
    %1935 = vmatpush1.msra.mxu0 0.0
    %1936 = vmatprep.subr.mxu0 0.0
    %1937 = vmatpush1.msra.mxu0 0.0
    %1938 = vmatprep.subr.mxu0 0.0
    %1939 = vmatpush1.msra.mxu0 0.0
    %1940 = vmatprep.subr.mxu0 0.0
    %1941 = vmatpush1.msra.mxu0 0.0
    %1942 = vmatprep.subr.mxu0 0.0
    %1943 = vmatpush1.msra.mxu0 0.0
    %1944 = vmatprep.subr.mxu0 0.0
    %1945 = vmatpush1.msra.mxu0 0.0
    %1946 = vmatprep.subr.mxu0 0.0
    %1947 = vmatpush1.msra.mxu0 0.0
    %1948 = vmatprep.subr.mxu0 0.0
    %1949 = vmatpush1.msra.mxu0 0.0
    %1950 = vmatprep.subr.mxu0 0.0
    %1951 = vmatpush1.msra.mxu0 0.0
    %1952 = vmatprep.subr.mxu0 0.0
    %1953 = vmatpush1.msra.mxu0 0.0
    %1954 = vmatprep.subr.mxu0 0.0
    %1955 = vmatpush1.msra.mxu0 0.0
    %1956 = vmatprep.mubr.f32.mxu0 0.0
    %1957 = vmatmul.mubr.f32.gmra.mrb[0].mxu0 %v1890
    %v1958 = vpop.f32.mrb[0].mxu0
    %v1959 = vadd.f32 0.0, %v1958
    %v1960 = vpop.f32.mrb[0].mxu0
    %1961 = vdwg.mxu0
    %v1962 = vadd.f32 %v1224, %v1959
    %v1963 = vxor.u32 %v1962, 2147483648
    %v1964 = vmul.f32 %v1963, 1.442695
    %v1965 = vpow.pop %v1964
    %v1966 = vadd.f32 %v1965, 1.0
    %v1967 = vrcp.pop %v1966
    %v1968 = vmul.f32 1.0, %v1967
    %v1969 = vtanh.pop %v1962
    %v1970 = vmul.f32 %v1968, %v1878
    %1972 = vrot.lane.b32.xlu0 %v1969, 64
    %v1973 = vpop.permute.xlu0 %1972
    %v1975 = vmul.f32 %v1968, %v1973
    %1977 = vrot.lane.b32.xlu0 %v1975, 32
    %v1978 = vpop.permute.xlu0 %1977
    %v1980 = vadd.f32 %v1970, %v1978
    %v1981 = vtanh.pop %v1980
    %1983 = vrot.lane.b32.xlu0 %v1981, 64
    %v1984 = vpop.permute.xlu0 %1983
    %v1986 = vmul.f32 %v1968, %v1984
    %v1987 = vsel %vm1453, %v1986, %v1885
    %v1988 = vsel %vm1446, %v1986, %v1886
    %1990 = vrot.lane.b32.xlu0 %v1986, 32
    %v1991 = vpop.permute.xlu0 %1990
    %v1992 = vsel %vm98, %v1991, 0
    %1994 = vmatprep.subr.mxu0 0.0
    %1995 = vmatpush1.msra.mxu0 %v1053
    %1996 = vmatprep.subr.mxu0 0.0
    %1997 = vmatpush1.msra.mxu0 %v1054
    %1998 = vmatprep.subr.mxu0 0.0
    %1999 = vmatpush1.msra.mxu0 %v1055
    %2000 = vmatprep.subr.mxu0 0.0
    %2001 = vmatpush1.msra.mxu0 %v1056
    %2002 = vmatprep.subr.mxu0 0.0
    %2003 = vmatpush1.msra.mxu0 0.0
    %2004 = vmatprep.subr.mxu0 0.0
    %2005 = vmatpush1.msra.mxu0 0.0
    %2006 = vmatprep.subr.mxu0 0.0
    %2007 = vmatpush1.msra.mxu0 0.0
    %2008 = vmatprep.subr.mxu0 0.0
    %2009 = vmatpush1.msra.mxu0 0.0
    %2010 = vmatprep.subr.mxu0 0.0
    %2011 = vmatpush1.msra.mxu0 0.0
    %2012 = vmatprep.subr.mxu0 0.0
    %2013 = vmatpush1.msra.mxu0 0.0
    %2014 = vmatprep.subr.mxu0 0.0
    %2015 = vmatpush1.msra.mxu0 0.0
    %2016 = vmatprep.subr.mxu0 0.0
    %2017 = vmatpush1.msra.mxu0 0.0
    %2018 = vmatprep.subr.mxu0 0.0
    %2019 = vmatpush1.msra.mxu0 0.0
    %2020 = vmatprep.subr.mxu0 0.0
    %2021 = vmatpush1.msra.mxu0 0.0
    %2022 = vmatprep.subr.mxu0 0.0
    %2023 = vmatpush1.msra.mxu0 0.0
    %2024 = vmatprep.subr.mxu0 0.0
    %2025 = vmatpush1.msra.mxu0 0.0
    %2026 = vmatprep.subr.mxu0 0.0
    %2027 = vmatpush1.msra.mxu0 0.0
    %2028 = vmatprep.subr.mxu0 0.0
    %2029 = vmatpush1.msra.mxu0 0.0
    %2030 = vmatprep.subr.mxu0 0.0
    %2031 = vmatpush1.msra.mxu0 0.0
    %2032 = vmatprep.subr.mxu0 0.0
    %2033 = vmatpush1.msra.mxu0 0.0
    %2034 = vmatprep.subr.mxu0 0.0
    %2035 = vmatpush1.msra.mxu0 0.0
    %2036 = vmatprep.subr.mxu0 0.0
    %2037 = vmatpush1.msra.mxu0 0.0
    %2038 = vmatprep.subr.mxu0 0.0
    %2039 = vmatpush1.msra.mxu0 0.0
    %2040 = vmatprep.subr.mxu0 0.0
    %2041 = vmatpush1.msra.mxu0 0.0
    %2042 = vmatprep.subr.mxu0 0.0
    %2043 = vmatpush1.msra.mxu0 0.0
    %2044 = vmatprep.subr.mxu0 0.0
    %2045 = vmatpush1.msra.mxu0 0.0
    %2046 = vmatprep.subr.mxu0 0.0
    %2047 = vmatpush1.msra.mxu0 0.0
    %2048 = vmatprep.subr.mxu0 0.0
    %2049 = vmatpush1.msra.mxu0 0.0
    %2050 = vmatprep.subr.mxu0 0.0
    %2051 = vmatpush1.msra.mxu0 0.0
    %2052 = vmatprep.subr.mxu0 0.0
    %2053 = vmatpush1.msra.mxu0 0.0
    %2054 = vmatprep.subr.mxu0 0.0
    %2055 = vmatpush1.msra.mxu0 0.0
    %2056 = vmatprep.subr.mxu0 0.0
    %2057 = vmatpush1.msra.mxu0 0.0
    %2058 = vmatprep.mubr.f32.mxu0 0.0
    %2059 = vmatmul.mubr.f32.gmra.mrb[0].mxu0 %v1992
    %v2060 = vpop.f32.mrb[0].mxu0
    %v2061 = vadd.f32 0.0, %v2060
    %v2062 = vpop.f32.mrb[0].mxu0
    %2063 = vdwg.mxu0
    %v2064 = vadd.f32 %v1229, %v2061
    %v2065 = vxor.u32 %v2064, 2147483648
    %v2066 = vmul.f32 %v2065, 1.442695
    %v2067 = vpow.pop %v2066
    %v2068 = vadd.f32 %v2067, 1.0
    %v2069 = vrcp.pop %v2068
    %v2070 = vmul.f32 1.0, %v2069
    %v2071 = vtanh.pop %v2064
    %v2072 = vmul.f32 %v2070, %v1980
    %2074 = vrot.lane.b32.xlu0 %v2071, 64
    %v2075 = vpop.permute.xlu0 %2074
    %v2077 = vmul.f32 %v2070, %v2075
    %2079 = vrot.lane.b32.xlu0 %v2077, 32
    %v2080 = vpop.permute.xlu0 %2079
    %v2082 = vadd.f32 %v2072, %v2080
    %v2083 = vtanh.pop %v2082
    %2085 = vrot.lane.b32.xlu0 %v2083, 64
    %v2086 = vpop.permute.xlu0 %2085
    %v2088 = vmul.f32 %v2070, %v2086
    %v2089 = vsel %vm1339, %v2088, %v1987
    %v2090 = vsel %vm1332, %v2088, %v1988
    %2092 = vrot.lane.b32.xlu0 %v2089, 32
    %v2093 = vpop.permute.xlu0 %2092
    %2096 = vrot.lane.b32.xlu0 %v2090, 32
    %v2097 = vpop.permute.xlu0 %2096
    %v2099 = vsel %vm57, %v2093, %v2097
    %v2100 = vld [vmem:[#allocation2 + $0xb0] sm:$0xff]
    %v2101 = vld [vmem:[#allocation2 + $0xb8] sm:$0xff]
    %v2102 = vld [vmem:[#allocation2 + $0xc0] sm:$0xff]
    %v2103 = vld [vmem:[#allocation2 + $0xc8] sm:$0xff]
    %v2104 = vld [vmem:[#allocation2 + $0xd0] sm:$0x1]
    %v2105 = vlaneseq
    %v2106 = vshrl.u32 %v2105, 7
    %v2107 = vsub.s32 0, %v2106
    %v2108 = vrot.slane %v2104, %v2107
    %v2110 = vsel %vm98, %v2099, 0
    %2112 = vmatprep.subr.mxu0 0.0
    %2113 = vmatpush1.msra.mxu0 %v2100
    %2114 = vmatprep.subr.mxu0 0.0
    %2115 = vmatpush1.msra.mxu0 %v2101
    %2116 = vmatprep.subr.mxu0 0.0
    %2117 = vmatpush1.msra.mxu0 %v2102
    %2118 = vmatprep.subr.mxu0 0.0
    %2119 = vmatpush1.msra.mxu0 %v2103
    %2120 = vmatprep.subr.mxu0 0.0
    %2121 = vmatpush1.msra.mxu0 0.0
    %2122 = vmatprep.subr.mxu0 0.0
    %2123 = vmatpush1.msra.mxu0 0.0
    %2124 = vmatprep.subr.mxu0 0.0
    %2125 = vmatpush1.msra.mxu0 0.0
    %2126 = vmatprep.subr.mxu0 0.0
    %2127 = vmatpush1.msra.mxu0 0.0
    %2128 = vmatprep.subr.mxu0 0.0
    %2129 = vmatpush1.msra.mxu0 0.0
    %2130 = vmatprep.subr.mxu0 0.0
    %2131 = vmatpush1.msra.mxu0 0.0
    %2132 = vmatprep.subr.mxu0 0.0
    %2133 = vmatpush1.msra.mxu0 0.0
    %2134 = vmatprep.subr.mxu0 0.0
    %2135 = vmatpush1.msra.mxu0 0.0
    %2136 = vmatprep.subr.mxu0 0.0
    %2137 = vmatpush1.msra.mxu0 0.0
    %2138 = vmatprep.subr.mxu0 0.0
    %2139 = vmatpush1.msra.mxu0 0.0
    %2140 = vmatprep.subr.mxu0 0.0
    %2141 = vmatpush1.msra.mxu0 0.0
    %2142 = vmatprep.subr.mxu0 0.0
    %2143 = vmatpush1.msra.mxu0 0.0
    %2144 = vmatprep.subr.mxu0 0.0
    %2145 = vmatpush1.msra.mxu0 0.0
    %2146 = vmatprep.subr.mxu0 0.0
    %2147 = vmatpush1.msra.mxu0 0.0
    %2148 = vmatprep.subr.mxu0 0.0
    %2149 = vmatpush1.msra.mxu0 0.0
    %2150 = vmatprep.subr.mxu0 0.0
    %2151 = vmatpush1.msra.mxu0 0.0
    %2152 = vmatprep.subr.mxu0 0.0
    %2153 = vmatpush1.msra.mxu0 0.0
    %2154 = vmatprep.subr.mxu0 0.0
    %2155 = vmatpush1.msra.mxu0 0.0
    %2156 = vmatprep.subr.mxu0 0.0
    %2157 = vmatpush1.msra.mxu0 0.0
    %2158 = vmatprep.subr.mxu0 0.0
    %2159 = vmatpush1.msra.mxu0 0.0
    %2160 = vmatprep.subr.mxu0 0.0
    %2161 = vmatpush1.msra.mxu0 0.0
    %2162 = vmatprep.subr.mxu0 0.0
    %2163 = vmatpush1.msra.mxu0 0.0
    %2164 = vmatprep.subr.mxu0 0.0
    %2165 = vmatpush1.msra.mxu0 0.0
    %2166 = vmatprep.subr.mxu0 0.0
    %2167 = vmatpush1.msra.mxu0 0.0
    %2168 = vmatprep.subr.mxu0 0.0
    %2169 = vmatpush1.msra.mxu0 0.0
    %2170 = vmatprep.subr.mxu0 0.0
    %2171 = vmatpush1.msra.mxu0 0.0
    %2172 = vmatprep.subr.mxu0 0.0
    %2173 = vmatpush1.msra.mxu0 0.0
    %2174 = vmatprep.subr.mxu0 0.0
    %2175 = vmatpush1.msra.mxu0 0.0
    %2176 = vmatprep.mubr.f32.mxu0 0.0
    %2177 = vmatmul.mubr.f32.gmra.mrb[0].mxu0 %v2110
    %v2178 = vpop.f32.mrb[0].mxu0
    %v2179 = vadd.f32 %v2108, %v2178
    %v2180 = vpop.f32.mrb[0].mxu0
    %2181 = vdwg.mxu0
    %v2182 = vxor.u32 %v2179, 2147483648
    %v2183 = vmul.f32 %v2182, 1.442695
    %v2184 = vpow.pop %v2183
    %v2185 = vadd.f32 %v2184, 1.0
    %v2186 = vrcp.pop %v2185
    %v2187 = vmul.f32 1.0, %v2186
    %vm2188 = vcmask 15360
    %2189 = vst.msk [vmem:[%s3] sm:$0xff] %vm2188, %v2187
    // Predicated region
    $region18: #{sentiment_lstm_forward.1} parent=1 // pred_check
      _
    $region19: #{sentiment_lstm_forward.1} parent=1 // pred_check_branch
      %2191 = sbr.rel (0) target = $region21
    $region20: #{sentiment_lstm_forward.1} parent=1 // pred_region
      _
    $region21: #{sentiment_lstm_forward.1} parent=1 // pred_fallthru
      _
    // Predicated region
    $region22: #{sentiment_lstm_forward.1} parent=1 // pred_check
      _
    $region23: #{sentiment_lstm_forward.1} parent=1 // pred_check_branch
      %2193 = sbr.rel (0) target = $region25
    $region24: #{sentiment_lstm_forward.1} parent=1 // pred_region
      _
    $region25: #{sentiment_lstm_forward.1} parent=1 // pred_fallthru
      _
    %2194 = vsyncpa [#allocation3], 1

</llo_original>
